<compile_context>
chip_gen: v5e
topology: v5e:2x2
jax: 0.10.0
libtpu: 0.0.40
codegen_flags: <defaults>
</compile_context>

<pallas_src>
import functools

import jax
import jax.numpy as jnp
from jax.experimental import pallas as pl
from jax.experimental.pallas import tpu as pltpu

BN_EPS = 1e-5
LANE = 128
SUBLANE = 8


def _round_up(x, m):
    return ((x + m - 1) // m) * m


def _pad2d(a, rows, cols):
    return jnp.pad(a, ((0, rows - a.shape[0]), (0, cols - a.shape[1])))


# ---------------------------------------------------------------------------
# Kernel 1: GCN layer 1 on one row tile of A.
#   h1_tile = affine1( relu( (A_tile @ X) @ Wg1 + bg1 ) )
# ( (A@X)@W == A@(X@W); with feature dims padded to 128 both orders cost the
#   same MXU work, and this order only needs the A row tile plus resident X. )
# ---------------------------------------------------------------------------
def _gcn1_kernel(a_ref, x_ref, wg1_ref, bg1_ref, s1_ref, t1_ref, h1_ref):
    ax = jnp.dot(a_ref[...], x_ref[...], preferred_element_type=jnp.float32)
    h = jnp.dot(ax.astype(jnp.bfloat16), wg1_ref[...],
                preferred_element_type=jnp.float32)
    h = jnp.maximum(h + bg1_ref[...], 0.0)
    h = h * s1_ref[...] + t1_ref[...]        # folded eval-mode BN1 (pure affine)
    h1_ref[...] = h.astype(h1_ref.dtype)


# ---------------------------------------------------------------------------
# Kernel 2: GCN layer 2 + lin1/lin2 + per-tile mean-pool contribution.
#   h2     = relu( (A_tile @ H1) @ Wg2 + bg2 )    (BN2 folded into lin1 below)
#   h3     = relu( h2 @ Wl1' + bl1' )
#   x_tile = h3 @ Wl2 + bl2                       -> per-node embeddings tile
#   prep_i = P[:, tile] @ x_tile                  -> partial pooled sums
# ---------------------------------------------------------------------------
def _gcn2_tail_kernel(a_ref, h1_ref, p_ref, wg2_ref, bg2_ref,
                      wl1_ref, bl1_ref, wl2_ref, bl2_ref,
                      x_out_ref, prep_ref):
    ah = jnp.dot(a_ref[...], h1_ref[...], preferred_element_type=jnp.float32)
    h = jnp.dot(ah.astype(jnp.bfloat16), wg2_ref[...],
                preferred_element_type=jnp.float32)
    h = jnp.maximum(h + bg2_ref[...], 0.0)
    h = jnp.dot(h.astype(jnp.bfloat16), wl1_ref[...],
                preferred_element_type=jnp.float32) + bl1_ref[...]
    h = jnp.maximum(h, 0.0)
    h = jnp.dot(h.astype(jnp.bfloat16), wl2_ref[...],
                preferred_element_type=jnp.float32) + bl2_ref[...]
    x_out_ref[...] = h
    prep_ref[0] = jnp.dot(p_ref[...], h, preferred_element_type=jnp.float32)


# ---------------------------------------------------------------------------
# Kernel 3: tiny classifier on pooled graph reps (ungridded, all-VMEM, f32).
# ---------------------------------------------------------------------------
def _classifier_kernel(rep_ref, wc1_ref, bc1_ref, wc2_ref, bc2_ref, out_ref):
    z = jnp.dot(rep_ref[...], wc1_ref[...], preferred_element_type=jnp.float32)
    z = jnp.maximum(z + bc1_ref[...], 0.0)
    out_ref[...] = (jnp.dot(z, wc2_ref[...], preferred_element_type=jnp.float32)
                    + bc2_ref[...])


@functools.partial(jax.jit, static_argnames=("tile_rows",))
def i2bgnn_forward(a_hat, x, pool_mat, params, *, tile_rows=256):
    N, Fin = x.shape
    B = pool_mat.shape[0]
    D = params["wg1"].shape[1]
    C = params["wc2"].shape[1]

    # ---- padded sizes: lane-dense features, sublane-friendly batch --------
    Fp = _round_up(Fin, LANE)
    Dp = _round_up(D, LANE)
    Cp = _round_up(C, LANE)
    Bp = _round_up(B, SUBLANE)
    tm = min(tile_rows, _round_up(N, LANE))      # A row-tile height
    Np = _round_up(N, tm)
    T = Np // tm

    bf16, f32 = jnp.bfloat16, jnp.float32

    # ---- fold eval-mode BatchNorms -----------------------------------------
    s1 = params["bn1_g"] * jax.lax.rsqrt(params["bn1_v"] + BN_EPS)
    t1 = params["bn1_b"] - params["bn1_m"] * s1
    s2 = params["bn2_g"] * jax.lax.rsqrt(params["bn2_v"] + BN_EPS)
    t2 = params["bn2_b"] - params["bn2_m"] * s2
    wl1_fold = s2.reshape(-1, 1) * params["wl1"]     # exact fold of BN2 -> lin1
    bl1_fold = params["bl1"] + t2 @ params["wl1"]

    # ---- pad + cast operands ----------------------------------------------
    a_p = _pad2d(a_hat, Np, Np).astype(bf16)
    x_p = _pad2d(x, Np, Fp).astype(bf16)
    p_p = _pad2d(pool_mat, Bp, Np).astype(f32)

    wg1 = _pad2d(params["wg1"], Fp, Dp).astype(bf16)
    bg1 = _pad2d(params["bg1"], 1, Dp).astype(f32)
    s1p = _pad2d(s1, 1, Dp).astype(f32)
    t1p = _pad2d(t1, 1, Dp).astype(f32)

    wg2 = _pad2d(params["wg2"], Dp, Dp).astype(bf16)
    bg2 = _pad2d(params["bg2"], 1, Dp).astype(f32)
    wl1 = _pad2d(wl1_fold, Dp, Dp).astype(bf16)
    bl1 = _pad2d(bl1_fold, 1, Dp).astype(f32)
    wl2 = _pad2d(params["wl2"], Dp, Dp).astype(bf16)
    bl2 = _pad2d(params["bl2"], 1, Dp).astype(f32)

    wc1 = _pad2d(params["wc1"], Dp, Dp).astype(f32)
    bc1 = _pad2d(params["bc1"], 1, Dp).astype(f32)
    wc2 = _pad2d(params["wc2"], Dp, Cp).astype(f32)
    bc2 = _pad2d(params["bc2"], 1, Cp).astype(f32)

    row_vec = pl.BlockSpec((1, Dp), lambda i: (0, 0))

    def vmem_limit(per_iter_bytes):
        # double-buffer everything + margin; never below the 16 MiB default.
        return int(min(max(2 * per_iter_bytes + (4 << 20), 16 << 20), 96 << 20))

    # -------------------- pass 1: GCN layer 1 -> H1 [Np, Dp] bf16 ----------
    vmem1 = tm * Np * 2 + Np * Fp * 2 + Fp * Dp * 2 + 3 * Dp * 4 + tm * Dp * 2
    flops1 = 2 * Np * Np * Fp + 2 * Np * Fp * Dp
    bytes1 = (Np * Np + Np * Fp + Fp * Dp + Np * Dp) * 2 + 3 * Dp * 4
    h1 = pl.pallas_call(
        _gcn1_kernel,
        out_shape=jax.ShapeDtypeStruct((Np, Dp), bf16),
        grid=(T,),
        in_specs=[
            pl.BlockSpec((tm, Np), lambda i: (i, 0)),   # A row tile (streamed)
            pl.BlockSpec((Np, Fp), lambda i: (0, 0)),   # X (resident)
            pl.BlockSpec((Fp, Dp), lambda i: (0, 0)),   # Wg1
            row_vec, row_vec, row_vec,                  # bg1, scale1, shift1
        ],
        out_specs=pl.BlockSpec((tm, Dp), lambda i: (i, 0)),
        compiler_params=pltpu.CompilerParams(
            dimension_semantics=("parallel",),
            vmem_limit_bytes=vmem_limit(vmem1),
        ),
        cost_estimate=pl.CostEstimate(flops=flops1, transcendentals=0,
                                      bytes_accessed=bytes1),
    )(a_p, x_p, wg1, bg1, s1p, t1p)

    # ---- pass 2: GCN layer 2 + lin1/lin2 + per-tile pooling ----------------
    vmem2 = (tm * Np * 2 + Np * Dp * 2 + Bp * tm * 4 + 3 * Dp * Dp * 2
             + 3 * Dp * 4 + tm * Dp * 4 + Bp * Dp * 4)
    flops2 = 2 * Np * Np * Dp + 6 * Np * Dp * Dp + 2 * Bp * Np * Dp
    bytes2 = ((Np * Np + Np * Dp + 3 * Dp * Dp) * 2 + Bp * Np * 4
              + Np * Dp * 4 + T * Bp * Dp * 4 + 3 * Dp * 4)
    x_out_p, prep = pl.pallas_call(
        _gcn2_tail_kernel,
        out_shape=(
            jax.ShapeDtypeStruct((Np, Dp), f32),        # per-node embeddings
            jax.ShapeDtypeStruct((T, Bp, Dp), f32),     # partial pooled sums
        ),
        grid=(T,),
        in_specs=[
            pl.BlockSpec((tm, Np), lambda i: (i, 0)),   # A row tile (streamed)
            pl.BlockSpec((Np, Dp), lambda i: (0, 0)),   # H1 (resident)
            pl.BlockSpec((Bp, tm), lambda i: (0, i)),   # P columns for tile
            pl.BlockSpec((Dp, Dp), lambda i: (0, 0)),   # Wg2
            row_vec,                                    # bg2
            pl.BlockSpec((Dp, Dp), lambda i: (0, 0)),   # Wl1' (BN2 folded)
            row_vec,                                    # bl1'
            pl.BlockSpec((Dp, Dp), lambda i: (0, 0)),   # Wl2
            row_vec,                                    # bl2
        ],
        out_specs=(
            pl.BlockSpec((tm, Dp), lambda i: (i, 0)),
            pl.BlockSpec((1, Bp, Dp), lambda i: (i, 0, 0)),
        ),
        compiler_params=pltpu.CompilerParams(
            dimension_semantics=("parallel",),
            vmem_limit_bytes=vmem_limit(vmem2),
        ),
        cost_estimate=pl.CostEstimate(flops=flops2, transcendentals=0,
                                      bytes_accessed=bytes2),
    )(a_p, h1, p_p, wg2, bg2, wl1, bl1, wl2, bl2)

    rep_p = jnp.sum(prep, axis=0)                       # [Bp, Dp], tiny reduce

    # -------------------- pass 3: classifier (tiny, ungridded) -------------
    vmem = pl.BlockSpec(memory_space=pltpu.MemorySpace.VMEM)
    logits_p = pl.pallas_call(
        _classifier_kernel,
        out_shape=jax.ShapeDtypeStruct((Bp, Cp), f32),
        in_specs=[vmem] * 5,
        out_specs=vmem,
    )(rep_p, wc1, bc1, wc2, bc2)

    return x_out_p[:N, :D], rep_p[:B, :D], logits_p[:B, :C]


# ---------------------------------------------------------------------------
# Graph preprocessing (plain JAX) and parameter init.
# ---------------------------------------------------------------------------
def build_normalized_adjacency(edge_index, edge_weight, num_nodes):
    """PyG GCNConv gcn_norm with add_self_loops=True, densified to [N, N]."""
    src = edge_index[0]
    dst = edge_index[1]
    loop = jnp.arange(num_nodes, dtype=src.dtype)
    src = jnp.concatenate([src, loop])
    dst = jnp.concatenate([dst, loop])
    ew = jnp.concatenate([edge_weight, jnp.ones((num_nodes,), edge_weight.dtype)])

    deg = jnp.zeros((num_nodes,), jnp.float32).at[dst].add(ew)
    deg_inv_sqrt = jnp.where(deg > 0, 1.0 / jnp.sqrt(deg), 0.0)
    norm = deg_inv_sqrt[src] * ew * deg_inv_sqrt[dst]

    # out[i] = sum_{e: dst_e = i} norm_e * x[src_e]  =>  A[dst, src] += norm
    return jnp.zeros((num_nodes, num_nodes), jnp.float32).at[dst, src].add(norm)


def build_pool_matrix(batch, num_graphs, num_nodes):
    """Mean-pool matrix P[b, n] = 1/|graph b| if batch[n] == b else 0."""
    one_hot = (batch[None, :] == jnp.arange(num_graphs)[:, None]).astype(jnp.float32)
    counts = jnp.maximum(one_hot.sum(axis=1, keepdims=True), 1.0)
    return one_hot / counts


def init_params(key, in_channels, dim, out_channels):
    ks = jax.random.split(key, 6)

    def lin(k, fan_in, fan_out):
        bound = 1.0 / jnp.sqrt(jnp.float32(fan_in))
        kw, kb = jax.random.split(k)
        w = jax.random.uniform(kw, (fan_in, fan_out), jnp.float32, -bound, bound)
        b = jax.random.uniform(kb, (1, fan_out), jnp.float32, -bound, bound)
        return w, b

    wg1, bg1 = lin(ks[0], in_channels, dim)
    wg2, bg2 = lin(ks[1], dim, dim)
    wl1, bl1 = lin(ks[2], dim, dim)
    wl2, bl2 = lin(ks[3], dim, dim)
    wc1, bc1 = lin(ks[4], dim, dim)
    wc2, bc2 = lin(ks[5], dim, out_channels)

    bn = lambda: dict(
        g=jnp.ones((1, dim), jnp.float32), b=jnp.zeros((1, dim), jnp.float32),
        m=jnp.zeros((1, dim), jnp.float32), v=jnp.ones((1, dim), jnp.float32))
    bn1, bn2 = bn(), bn()

    return dict(
        wg1=wg1, bg1=bg1,
        bn1_g=bn1["g"], bn1_b=bn1["b"], bn1_m=bn1["m"], bn1_v=bn1["v"],
        wg2=wg2, bg2=bg2,
        bn2_g=bn2["g"], bn2_b=bn2["b"], bn2_m=bn2["m"], bn2_v=bn2["v"],
        wl1=wl1, bl1=bl1, wl2=wl2, bl2=bl2,
        wc1=wc1, bc1=bc1, wc2=wc2, bc2=bc2,
    )


def _reference_forward(a_hat, x, pool_mat, params):
    """Pure-JAX f32 reference of the inference forward (for validation)."""
    h = x @ params["wg1"]
    h = a_hat @ h + params["bg1"]
    h = jnp.maximum(h, 0.0)
    h = (h - params["bn1_m"]) / jnp.sqrt(params["bn1_v"] + BN_EPS) \
        * params["bn1_g"] + params["bn1_b"]
    h = h @ params["wg2"]
    h = a_hat @ h + params["bg2"]
    h = jnp.maximum(h, 0.0)
    h = (h - params["bn2_m"]) / jnp.sqrt(params["bn2_v"] + BN_EPS) \
        * params["bn2_g"] + params["bn2_b"]
    h = jnp.maximum(h @ params["wl1"] + params["bl1"], 0.0)
    x_out = h @ params["wl2"] + params["bl2"]
    rep = pool_mat @ x_out
    z = jnp.maximum(rep @ params["wc1"] + params["bc1"], 0.0)
    logits = z @ params["wc2"] + params["bc2"]
    return x_out, rep, logits


if __name__ == "__main__":
    key = jax.random.PRNGKey(0)
    k_x, k_ei, k_ea, k_p = jax.random.split(key, 4)

    # Small synthetic graph batch: 2 graphs x 8 nodes = 16 nodes, 40 edges.
    in_channels, dim, out_channels = 8, 32, 4
    num_nodes, num_edges, num_graphs = 16, 40, 2

    x = jax.random.normal(k_x, (num_nodes, in_channels), jnp.float32)
    edge_index = jax.random.randint(k_ei, (2, num_edges), 0, num_nodes, jnp.int32)
    edge_attr = jax.random.uniform(k_ea, (num_edges, 2), jnp.float32, 0.1, 1.0)
    batch = jnp.concatenate(
        [jnp.zeros((8,), jnp.int32), jnp.ones((8,), jnp.int32)])

    # which_edge_weight is None in the module -> use edge_attr[:, 1]
    edge_weight = edge_attr[:, 1]

    a_hat = build_normalized_adjacency(edge_index, edge_weight, num_nodes)
    pool_mat = build_pool_matrix(batch, num_graphs, num_nodes)
    params = init_params(k_p, in_channels, dim, out_channels)

    node_emb, graph_reps, logits = i2bgnn_forward(a_hat, x, pool_mat, params)
    jax.block_until_ready((node_emb, graph_reps, logits))

    assert node_emb.shape == (num_nodes, dim)
    assert graph_reps.shape == (num_graphs, dim)
    assert logits.shape == (num_graphs, out_channels)

    # Validate the bf16/f32-accumulation kernel path against an f32 reference.
    ref_x, ref_rep, ref_logits = _reference_forward(a_hat, x, pool_mat, params)
    for got, want in ((node_emb, ref_x), (graph_reps, ref_rep),
                      (logits, ref_logits)):
        assert jnp.allclose(got, want, rtol=0.1, atol=0.1), \
            f"mismatch: max abs err {jnp.max(jnp.abs(got - want))}"

    print("KERNEL_OK")
</pallas_src>

<mosaic_0001>
module attributes {stable_mosaic.version = 11 : i64} {
  func.func @_gcn2_tail_kernel(%arg0: i32, %arg1: memref<128x128xbf16, #tpu.memory_space<vmem>>, %arg2: memref<128x128xbf16, #tpu.memory_space<vmem>>, %arg3: memref<8x128xf32, #tpu.memory_space<vmem>>, %arg4: memref<128x128xbf16, #tpu.memory_space<vmem>>, %arg5: memref<1x128xf32, #tpu.memory_space<vmem>>, %arg6: memref<128x128xbf16, #tpu.memory_space<vmem>>, %arg7: memref<1x128xf32, #tpu.memory_space<vmem>>, %arg8: memref<128x128xbf16, #tpu.memory_space<vmem>>, %arg9: memref<1x128xf32, #tpu.memory_space<vmem>>, %arg10: memref<128x128xf32, #tpu.memory_space<vmem>>, %arg11: memref<1x8x128xf32, #tpu.memory_space<vmem>>) attributes {dimension_semantics = [#tpu.dimension_semantics<parallel>], iteration_bounds = array<i64: 1>, scalar_prefetch = 0 : i64, scratch_operands = 0 : i64, tpu.core_type = #tpu.core_type<tc>, window_params = [{transform_indices = @transform_0, window_bounds = array<i64: 128, 128>}, {pipeline_mode = #tpu.pipeline_mode<synchronous>, transform_indices = @transform_1, window_bounds = array<i64: 128, 128>}, {transform_indices = @transform_2, window_bounds = array<i64: 8, 128>}, {pipeline_mode = #tpu.pipeline_mode<synchronous>, transform_indices = @transform_3, window_bounds = array<i64: 128, 128>}, {pipeline_mode = #tpu.pipeline_mode<synchronous>, transform_indices = @transform_4, window_bounds = array<i64: 1, 128>}, {pipeline_mode = #tpu.pipeline_mode<synchronous>, transform_indices = @transform_5, window_bounds = array<i64: 128, 128>}, {pipeline_mode = #tpu.pipeline_mode<synchronous>, transform_indices = @transform_6, window_bounds = array<i64: 1, 128>}, {pipeline_mode = #tpu.pipeline_mode<synchronous>, transform_indices = @transform_7, window_bounds = array<i64: 128, 128>}, {pipeline_mode = #tpu.pipeline_mode<synchronous>, transform_indices = @transform_8, window_bounds = array<i64: 1, 128>}, {transform_indices = @transform_9, window_bounds = array<i64: 128, 128>}, {transform_indices = @transform_10, window_bounds = array<i64: 1, 8, 128>}]} {
    %c0 = arith.constant 0 : index
    %c0_0 = arith.constant 0 : index
    %0 = vector.load %arg1[%c0, %c0_0] : memref<128x128xbf16, #tpu.memory_space<vmem>>, vector<128x128xbf16>
    %c0_1 = arith.constant 0 : index
    %c0_2 = arith.constant 0 : index
    %1 = vector.load %arg2[%c0_1, %c0_2] : memref<128x128xbf16, #tpu.memory_space<vmem>>, vector<128x128xbf16>
    %cst = arith.constant dense<0.000000e+00> : vector<128x128xf32>
    %2 = tpu.matmul %0, %1, %cst {dimension_numbers = #tpu.dot_dimension_numbers<[1], [0], [0], [1], [0, 0, 1, 1], [], []>} : vector<128x128xbf16>, vector<128x128xbf16>, vector<128x128xf32> -> vector<128x128xf32>
    %3 = arith.truncf %2 : vector<128x128xf32> to vector<128x128xbf16>
    %c0_3 = arith.constant 0 : index
    %c0_4 = arith.constant 0 : index
    %4 = vector.load %arg4[%c0_3, %c0_4] : memref<128x128xbf16, #tpu.memory_space<vmem>>, vector<128x128xbf16>
    %cst_5 = arith.constant dense<0.000000e+00> : vector<128x128xf32>
    %5 = tpu.matmul %3, %4, %cst_5 {dimension_numbers = #tpu.dot_dimension_numbers<[1], [0], [0], [1], [0, 0, 1, 1], [], []>} : vector<128x128xbf16>, vector<128x128xbf16>, vector<128x128xf32> -> vector<128x128xf32>
    %c0_6 = arith.constant 0 : index
    %c0_7 = arith.constant 0 : index
    %6 = vector.load %arg5[%c0_6, %c0_7] : memref<1x128xf32, #tpu.memory_space<vmem>>, vector<1x128xf32>
    %7 = vector.broadcast %6 : vector<1x128xf32> to vector<128x128xf32>
    %8 = arith.addf %5, %7 : vector<128x128xf32>
    %cst_8 = arith.constant 0.000000e+00 : f32
    %9 = vector.broadcast %cst_8 : f32 to vector<128x128xf32>
    %10 = arith.maximumf %8, %9 : vector<128x128xf32>
    %11 = arith.truncf %10 : vector<128x128xf32> to vector<128x128xbf16>
    %c0_9 = arith.constant 0 : index
    %c0_10 = arith.constant 0 : index
    %12 = vector.load %arg6[%c0_9, %c0_10] : memref<128x128xbf16, #tpu.memory_space<vmem>>, vector<128x128xbf16>
    %cst_11 = arith.constant dense<0.000000e+00> : vector<128x128xf32>
    %13 = tpu.matmul %11, %12, %cst_11 {dimension_numbers = #tpu.dot_dimension_numbers<[1], [0], [0], [1], [0, 0, 1, 1], [], []>} : vector<128x128xbf16>, vector<128x128xbf16>, vector<128x128xf32> -> vector<128x128xf32>
    %c0_12 = arith.constant 0 : index
    %c0_13 = arith.constant 0 : index
    %14 = vector.load %arg7[%c0_12, %c0_13] : memref<1x128xf32, #tpu.memory_space<vmem>>, vector<1x128xf32>
    %15 = vector.broadcast %14 : vector<1x128xf32> to vector<128x128xf32>
    %16 = arith.addf %13, %15 : vector<128x128xf32>
    %cst_14 = arith.constant 0.000000e+00 : f32
    %17 = vector.broadcast %cst_14 : f32 to vector<128x128xf32>
    %18 = arith.maximumf %16, %17 : vector<128x128xf32>
    %19 = arith.truncf %18 : vector<128x128xf32> to vector<128x128xbf16>
    %c0_15 = arith.constant 0 : index
    %c0_16 = arith.constant 0 : index
    %20 = vector.load %arg8[%c0_15, %c0_16] : memref<128x128xbf16, #tpu.memory_space<vmem>>, vector<128x128xbf16>
    %cst_17 = arith.constant dense<0.000000e+00> : vector<128x128xf32>
    %21 = tpu.matmul %19, %20, %cst_17 {dimension_numbers = #tpu.dot_dimension_numbers<[1], [0], [0], [1], [0, 0, 1, 1], [], []>} : vector<128x128xbf16>, vector<128x128xbf16>, vector<128x128xf32> -> vector<128x128xf32>
    %c0_18 = arith.constant 0 : index
    %c0_19 = arith.constant 0 : index
    %22 = vector.load %arg9[%c0_18, %c0_19] : memref<1x128xf32, #tpu.memory_space<vmem>>, vector<1x128xf32>
    %23 = vector.broadcast %22 : vector<1x128xf32> to vector<128x128xf32>
    %24 = arith.addf %21, %23 : vector<128x128xf32>
    %c0_20 = arith.constant 0 : index
    %c0_21 = arith.constant 0 : index
    %25 = vector.load %arg10[%c0_20, %c0_21] : memref<128x128xf32, #tpu.memory_space<vmem>>, vector<128x128xf32>
    tpu.vector_store %arg10[%c0_20, %c0_21], %24 {strides = array<i32>} : memref<128x128xf32, #tpu.memory_space<vmem>>, vector<128x128xf32>,
    %c0_22 = arith.constant 0 : index
    %c0_23 = arith.constant 0 : index
    %26 = vector.load %arg3[%c0_22, %c0_23] : memref<8x128xf32, #tpu.memory_space<vmem>>, vector<8x128xf32>
    %cst_24 = arith.constant dense<0.000000e+00> : vector<8x128xf32>
    %27 = tpu.matmul %26, %24, %cst_24 {dimension_numbers = #tpu.dot_dimension_numbers<[1], [0], [0], [1], [0, 0, 1, 1], [], []>} : vector<8x128xf32>, vector<128x128xf32>, vector<8x128xf32> -> vector<8x128xf32>
    %c0_25 = arith.constant 0 : index
    %c0_26 = arith.constant 0 : index
    %c0_27 = arith.constant 0 : index
    %28 = vector.load %arg11[%c0_25, %c0_26, %c0_27] : memref<1x8x128xf32, #tpu.memory_space<vmem>>, vector<1x8x128xf32>
    %29 = vector.shape_cast %28 : vector<1x8x128xf32> to vector<8x128xf32>
    %30 = vector.shape_cast %27 : vector<8x128xf32> to vector<1x8x128xf32>
    tpu.vector_store %arg11[%c0_25, %c0_26, %c0_27], %30 {strides = array<i32>} : memref<1x8x128xf32, #tpu.memory_space<vmem>>, vector<1x8x128xf32>,
    return
  }
  func.func @transform_0(%arg0: i32) -> (i32, i32) {
    %c0_i32 = arith.constant 0 : i32
    %c0_i32_0 = arith.constant 0 : i32
    return %arg0, %c0_i32 : i32, i32
  }
  func.func @transform_1(%arg0: i32) -> (i32, i32) {
    %c0_i32 = arith.constant 0 : i32
    %c0_i32_0 = arith.constant 0 : i32
    %c0_i32_1 = arith.constant 0 : i32
    return %c0_i32, %c0_i32_0 : i32, i32
  }
  func.func @transform_2(%arg0: i32) -> (i32, i32) {
    %c0_i32 = arith.constant 0 : i32
    %c0_i32_0 = arith.constant 0 : i32
    return %c0_i32, %arg0 : i32, i32
  }
  func.func @transform_3(%arg0: i32) -> (i32, i32) {
    %c0_i32 = arith.constant 0 : i32
    %c0_i32_0 = arith.constant 0 : i32
    %c0_i32_1 = arith.constant 0 : i32
    return %c0_i32, %c0_i32_0 : i32, i32
  }
  func.func @transform_4(%arg0: i32) -> (i32, i32) {
    %c0_i32 = arith.constant 0 : i32
    %c0_i32_0 = arith.constant 0 : i32
    %c0_i32_1 = arith.constant 0 : i32
    return %c0_i32, %c0_i32_0 : i32, i32
  }
  func.func @transform_5(%arg0: i32) -> (i32, i32) {
    %c0_i32 = arith.constant 0 : i32
    %c0_i32_0 = arith.constant 0 : i32
    %c0_i32_1 = arith.constant 0 : i32
    return %c0_i32, %c0_i32_0 : i32, i32
  }
  func.func @transform_6(%arg0: i32) -> (i32, i32) {
    %c0_i32 = arith.constant 0 : i32
    %c0_i32_0 = arith.constant 0 : i32
    %c0_i32_1 = arith.constant 0 : i32
    return %c0_i32, %c0_i32_0 : i32, i32
  }
  func.func @transform_7(%arg0: i32) -> (i32, i32) {
    %c0_i32 = arith.constant 0 : i32
    %c0_i32_0 = arith.constant 0 : i32
    %c0_i32_1 = arith.constant 0 : i32
    return %c0_i32, %c0_i32_0 : i32, i32
  }
  func.func @transform_8(%arg0: i32) -> (i32, i32) {
    %c0_i32 = arith.constant 0 : i32
    %c0_i32_0 = arith.constant 0 : i32
    %c0_i32_1 = arith.constant 0 : i32
    return %c0_i32, %c0_i32_0 : i32, i32
  }
  func.func @transform_9(%arg0: i32) -> (i32, i32) {
    %c0_i32 = arith.constant 0 : i32
    %c0_i32_0 = arith.constant 0 : i32
    return %arg0, %c0_i32 : i32, i32
  }
  func.func @transform_10(%arg0: i32) -> (i32, i32, i32) {
    %c0_i32 = arith.constant 0 : i32
    %c0_i32_0 = arith.constant 0 : i32
    %c0_i32_1 = arith.constant 0 : i32
    return %arg0, %c0_i32, %c0_i32_0 : i32, i32, i32
  }
}

module attributes {stable_mosaic.version = 11 : i64} {
  func.func @_gcn1_kernel(%arg0: i32, %arg1: memref<128x128xbf16, #tpu.memory_space<vmem>>, %arg2: memref<128x128xbf16, #tpu.memory_space<vmem>>, %arg3: memref<128x128xbf16, #tpu.memory_space<vmem>>, %arg4: memref<1x128xf32, #tpu.memory_space<vmem>>, %arg5: memref<1x128xf32, #tpu.memory_space<vmem>>, %arg6: memref<1x128xf32, #tpu.memory_space<vmem>>, %arg7: memref<128x128xbf16, #tpu.memory_space<vmem>>) attributes {dimension_semantics = [#tpu.dimension_semantics<parallel>], iteration_bounds = array<i64: 1>, scalar_prefetch = 0 : i64, scratch_operands = 0 : i64, tpu.core_type = #tpu.core_type<tc>, window_params = [{transform_indices = @transform_0, window_bounds = array<i64: 128, 128>}, {pipeline_mode = #tpu.pipeline_mode<synchronous>, transform_indices = @transform_1, window_bounds = array<i64: 128, 128>}, {pipeline_mode = #tpu.pipeline_mode<synchronous>, transform_indices = @transform_2, window_bounds = array<i64: 128, 128>}, {pipeline_mode = #tpu.pipeline_mode<synchronous>, transform_indices = @transform_3, window_bounds = array<i64: 1, 128>}, {pipeline_mode = #tpu.pipeline_mode<synchronous>, transform_indices = @transform_4, window_bounds = array<i64: 1, 128>}, {pipeline_mode = #tpu.pipeline_mode<synchronous>, transform_indices = @transform_5, window_bounds = array<i64: 1, 128>}, {transform_indices = @transform_6, window_bounds = array<i64: 128, 128>}]} {
    %c0 = arith.constant 0 : index
    %c0_0 = arith.constant 0 : index
    %0 = vector.load %arg1[%c0, %c0_0] : memref<128x128xbf16, #tpu.memory_space<vmem>>, vector<128x128xbf16>
    %c0_1 = arith.constant 0 : index
    %c0_2 = arith.constant 0 : index
    %1 = vector.load %arg2[%c0_1, %c0_2] : memref<128x128xbf16, #tpu.memory_space<vmem>>, vector<128x128xbf16>
    %cst = arith.constant dense<0.000000e+00> : vector<128x128xf32>
    %2 = tpu.matmul %0, %1, %cst {dimension_numbers = #tpu.dot_dimension_numbers<[1], [0], [0], [1], [0, 0, 1, 1], [], []>} : vector<128x128xbf16>, vector<128x128xbf16>, vector<128x128xf32> -> vector<128x128xf32>
    %3 = arith.truncf %2 : vector<128x128xf32> to vector<128x128xbf16>
    %c0_3 = arith.constant 0 : index
    %c0_4 = arith.constant 0 : index
    %4 = vector.load %arg3[%c0_3, %c0_4] : memref<128x128xbf16, #tpu.memory_space<vmem>>, vector<128x128xbf16>
    %cst_5 = arith.constant dense<0.000000e+00> : vector<128x128xf32>
    %5 = tpu.matmul %3, %4, %cst_5 {dimension_numbers = #tpu.dot_dimension_numbers<[1], [0], [0], [1], [0, 0, 1, 1], [], []>} : vector<128x128xbf16>, vector<128x128xbf16>, vector<128x128xf32> -> vector<128x128xf32>
    %c0_6 = arith.constant 0 : index
    %c0_7 = arith.constant 0 : index
    %6 = vector.load %arg4[%c0_6, %c0_7] : memref<1x128xf32, #tpu.memory_space<vmem>>, vector<1x128xf32>
    %7 = vector.broadcast %6 : vector<1x128xf32> to vector<128x128xf32>
    %8 = arith.addf %5, %7 : vector<128x128xf32>
    %cst_8 = arith.constant 0.000000e+00 : f32
    %9 = vector.broadcast %cst_8 : f32 to vector<128x128xf32>
    %10 = arith.maximumf %8, %9 : vector<128x128xf32>
    %c0_9 = arith.constant 0 : index
    %c0_10 = arith.constant 0 : index
    %11 = vector.load %arg5[%c0_9, %c0_10] : memref<1x128xf32, #tpu.memory_space<vmem>>, vector<1x128xf32>
    %12 = vector.broadcast %11 : vector<1x128xf32> to vector<128x128xf32>
    %13 = arith.mulf %10, %12 : vector<128x128xf32>
    %c0_11 = arith.constant 0 : index
    %c0_12 = arith.constant 0 : index
    %14 = vector.load %arg6[%c0_11, %c0_12] : memref<1x128xf32, #tpu.memory_space<vmem>>, vector<1x128xf32>
    %15 = vector.broadcast %14 : vector<1x128xf32> to vector<128x128xf32>
    %16 = arith.addf %13, %15 : vector<128x128xf32>
    %17 = arith.truncf %16 : vector<128x128xf32> to vector<128x128xbf16>
    %c0_13 = arith.constant 0 : index
    %c0_14 = arith.constant 0 : index
    %18 = vector.load %arg7[%c0_13, %c0_14] : memref<128x128xbf16, #tpu.memory_space<vmem>>, vector<128x128xbf16>
    tpu.vector_store %arg7[%c0_13, %c0_14], %17 {strides = array<i32>} : memref<128x128xbf16, #tpu.memory_space<vmem>>, vector<128x128xbf16>,
    return
  }
  func.func @transform_0(%arg0: i32) -> (i32, i32) {
    %c0_i32 = arith.constant 0 : i32
    %c0_i32_0 = arith.constant 0 : i32
    return %arg0, %c0_i32 : i32, i32
  }
  func.func @transform_1(%arg0: i32) -> (i32, i32) {
    %c0_i32 = arith.constant 0 : i32
    %c0_i32_0 = arith.constant 0 : i32
    %c0_i32_1 = arith.constant 0 : i32
    return %c0_i32, %c0_i32_0 : i32, i32
  }
  func.func @transform_2(%arg0: i32) -> (i32, i32) {
    %c0_i32 = arith.constant 0 : i32
    %c0_i32_0 = arith.constant 0 : i32
    %c0_i32_1 = arith.constant 0 : i32
    return %c0_i32, %c0_i32_0 : i32, i32
  }
  func.func @transform_3(%arg0: i32) -> (i32, i32) {
    %c0_i32 = arith.constant 0 : i32
    %c0_i32_0 = arith.constant 0 : i32
    %c0_i32_1 = arith.constant 0 : i32
    return %c0_i32, %c0_i32_0 : i32, i32
  }
  func.func @transform_4(%arg0: i32) -> (i32, i32) {
    %c0_i32 = arith.constant 0 : i32
    %c0_i32_0 = arith.constant 0 : i32
    %c0_i32_1 = arith.constant 0 : i32
    return %c0_i32, %c0_i32_0 : i32, i32
  }
  func.func @transform_5(%arg0: i32) -> (i32, i32) {
    %c0_i32 = arith.constant 0 : i32
    %c0_i32_0 = arith.constant 0 : i32
    %c0_i32_1 = arith.constant 0 : i32
    return %c0_i32, %c0_i32_0 : i32, i32
  }
  func.func @transform_6(%arg0: i32) -> (i32, i32) {
    %c0_i32 = arith.constant 0 : i32
    %c0_i32_0 = arith.constant 0 : i32
    return %arg0, %c0_i32 : i32, i32
  }
}

module attributes {stable_mosaic.version = 11 : i64} {
  func.func @_classifier_kernel(%arg0: memref<8x128xf32, #tpu.memory_space<vmem>>, %arg1: memref<128x128xf32, #tpu.memory_space<vmem>>, %arg2: memref<1x128xf32, #tpu.memory_space<vmem>>, %arg3: memref<128x128xf32, #tpu.memory_space<vmem>>, %arg4: memref<1x128xf32, #tpu.memory_space<vmem>>, %arg5: memref<8x128xf32, #tpu.memory_space<vmem>>) attributes {dimension_semantics = [], scalar_prefetch = 0 : i64, scratch_operands = 0 : i64, tpu.core_type = #tpu.core_type<tc>} {
    %c0 = arith.constant 0 : index
    %c0_0 = arith.constant 0 : index
    %0 = vector.load %arg0[%c0, %c0_0] : memref<8x128xf32, #tpu.memory_space<vmem>>, vector<8x128xf32>
    %c0_1 = arith.constant 0 : index
    %c0_2 = arith.constant 0 : index
    %1 = vector.load %arg1[%c0_1, %c0_2] : memref<128x128xf32, #tpu.memory_space<vmem>>, vector<128x128xf32>
    %cst = arith.constant dense<0.000000e+00> : vector<8x128xf32>
    %2 = tpu.matmul %0, %1, %cst {dimension_numbers = #tpu.dot_dimension_numbers<[1], [0], [0], [1], [0, 0, 1, 1], [], []>} : vector<8x128xf32>, vector<128x128xf32>, vector<8x128xf32> -> vector<8x128xf32>
    %c0_3 = arith.constant 0 : index
    %c0_4 = arith.constant 0 : index
    %3 = vector.load %arg2[%c0_3, %c0_4] : memref<1x128xf32, #tpu.memory_space<vmem>>, vector<1x128xf32>
    %4 = vector.broadcast %3 : vector<1x128xf32> to vector<8x128xf32>
    %5 = arith.addf %2, %4 : vector<8x128xf32>
    %cst_5 = arith.constant 0.000000e+00 : f32
    %6 = vector.broadcast %cst_5 : f32 to vector<8x128xf32>
    %7 = arith.maximumf %5, %6 : vector<8x128xf32>
    %c0_6 = arith.constant 0 : index
    %c0_7 = arith.constant 0 : index
    %8 = vector.load %arg3[%c0_6, %c0_7] : memref<128x128xf32, #tpu.memory_space<vmem>>, vector<128x128xf32>
    %cst_8 = arith.constant dense<0.000000e+00> : vector<8x128xf32>
    %9 = tpu.matmul %7, %8, %cst_8 {dimension_numbers = #tpu.dot_dimension_numbers<[1], [0], [0], [1], [0, 0, 1, 1], [], []>} : vector<8x128xf32>, vector<128x128xf32>, vector<8x128xf32> -> vector<8x128xf32>
    %c0_9 = arith.constant 0 : index
    %c0_10 = arith.constant 0 : index
    %10 = vector.load %arg4[%c0_9, %c0_10] : memref<1x128xf32, #tpu.memory_space<vmem>>, vector<1x128xf32>
    %11 = vector.broadcast %10 : vector<1x128xf32> to vector<8x128xf32>
    %12 = arith.addf %9, %11 : vector<8x128xf32>
    %c0_11 = arith.constant 0 : index
    %c0_12 = arith.constant 0 : index
    %13 = vector.load %arg5[%c0_11, %c0_12] : memref<8x128xf32, #tpu.memory_space<vmem>>, vector<8x128xf32>
    tpu.vector_store %arg5[%c0_11, %c0_12], %12 {strides = array<i32>} : memref<8x128xf32, #tpu.memory_space<vmem>>, vector<8x128xf32>,
    return
  }
}

</mosaic_0001>

<llo_original>
// kernel: i2bgnn_forward.5
$region0: #{i2bgnn_forward.5}
  #allocation0 [shape = 'u32[]', space=smem, size = 0x4, offset = 0x4, fixed_abs, tag = 'smem constant byte address 0x4 - core index']
  #allocation1 [shape = 'u32[72,128]{1,0:T(1,128)}', space=vmem, size = 0x9000, scoped, tag = 'internal scratch']
  %s0 = inlined_call_operand.vmem [shape: f32[8,128], index: 0, kind: input, shape index: {}]
  %s1 = inlined_call_operand.vmem [shape: f32[128,128], index: 1, kind: input, shape index: {}]
  %s2 = inlined_call_operand.vmem [shape: f32[1,128], index: 2, kind: input, shape index: {}]
  %s3 = inlined_call_operand.vmem [shape: f32[128,128], index: 3, kind: input, shape index: {}]
  %s4 = inlined_call_operand.vmem [shape: f32[1,128], index: 4, kind: input, shape index: {}]
  %s5 = inlined_call_operand.vmem [shape: f32[8,128], index: 5, kind: output, shape index: {}]
  %s6 = sld [smem:[#allocation0]]
  $region30: #{i2bgnn_forward.5} parent=0
    _
  %s8 = ssub.s32 1, %s6
  %s9 = scalar_select 0, %s8, %s6
  // Predicated region
  $region2: #{i2bgnn_forward.5} parent=0 // pred_check
    _
  $region3: #{i2bgnn_forward.5} parent=0 // pred_check_branch
    %11 = sbr.rel (0) target = $region5
  $region4: #{i2bgnn_forward.5} parent=0 // pred_region
    _
  $region5: #{i2bgnn_forward.5} parent=0 // pred_fallthru
    _
  // Predicated region
  $region6: #{i2bgnn_forward.5} parent=0 // pred_check
    _
  $region7: #{i2bgnn_forward.5} parent=0 // pred_check_branch
    %13 = sbr.rel (0) target = $region9
  $region8: #{i2bgnn_forward.5} parent=0 // pred_region
    _
  $region9: #{i2bgnn_forward.5} parent=0 // pred_fallthru
    _
  // Predicated region
  $region10: #{i2bgnn_forward.5} parent=0 // pred_check
    _
  $region11: #{i2bgnn_forward.5} parent=0 // pred_check_branch
    %15 = sbr.rel (0) target = $region13
  $region12: #{i2bgnn_forward.5} parent=0 // pred_region
    _
  $region13: #{i2bgnn_forward.5} parent=0 // pred_fallthru
    _
  // Predicated region
  $region14: #{i2bgnn_forward.5} parent=0 // pred_check
    _
  $region15: #{i2bgnn_forward.5} parent=0 // pred_check_branch
    %17 = sbr.rel (0) target = $region17
  $region16: #{i2bgnn_forward.5} parent=0 // pred_region
    _
  $region17: #{i2bgnn_forward.5} parent=0 // pred_fallthru
    _
  // Predicated region
  $region18: #{i2bgnn_forward.5} parent=0 // pred_check
    _
  $region19: #{i2bgnn_forward.5} parent=0 // pred_check_branch
    %19 = sbr.rel (0) target = $region21
  $region20: #{i2bgnn_forward.5} parent=0 // pred_region
    _
  $region21: #{i2bgnn_forward.5} parent=0 // pred_fallthru
    _
  %v20 = vld [vmem:[%s0] sm:$0xff]
  %v21 = vld [vmem:[%s1] sm:$0xff]
  %v22 = vld [vmem:[%s1 + $0x8] sm:$0xff]
  %v23 = vld [vmem:[%s1 + $0x10] sm:$0xff]
  %v24 = vld [vmem:[%s1 + $0x18] sm:$0xff]
  %v25 = vld [vmem:[%s1 + $0x20] sm:$0xff]
  %v26 = vld [vmem:[%s1 + $0x28] sm:$0xff]
  %v27 = vld [vmem:[%s1 + $0x30] sm:$0xff]
  %v28 = vld [vmem:[%s1 + $0x38] sm:$0xff]
  %v29 = vld [vmem:[%s1 + $0x40] sm:$0xff]
  %v30 = vld [vmem:[%s1 + $0x48] sm:$0xff]
  %v31 = vld [vmem:[%s1 + $0x50] sm:$0xff]
  %v32 = vld [vmem:[%s1 + $0x58] sm:$0xff]
  %v33 = vld [vmem:[%s1 + $0x60] sm:$0xff]
  %v34 = vld [vmem:[%s1 + $0x68] sm:$0xff]
  %v35 = vld [vmem:[%s1 + $0x70] sm:$0xff]
  %v36 = vld [vmem:[%s1 + $0x78] sm:$0xff]
  %v37 = vld [vmem:[%s2] sm:$0x1]
  %v39 = vperm.slane %v37, 0
  %41 = vmatpush.msra.mxu0 %v36
  %42 = vmatpush.msra.mxu0 %v35
  %43 = vmatpush.msra.mxu0 %v34
  %44 = vmatpush.msra.mxu0 %v33
  %45 = vmatpush.msra.mxu0 %v32
  %46 = vmatpush.msra.mxu0 %v31
  %47 = vmatpush.msra.mxu0 %v30
  %48 = vmatpush.msra.mxu0 %v29
  %49 = vmatpush.msra.mxu0 %v28
  %50 = vmatpush.msra.mxu0 %v27
  %51 = vmatpush.msra.mxu0 %v26
  %52 = vmatpush.msra.mxu0 %v25
  %53 = vmatpush.msra.mxu0 %v24
  %54 = vmatpush.msra.mxu0 %v23
  %55 = vmatpush.msra.mxu0 %v22
  %56 = vmatpush.msra.mxu0 %v21
  %57 = vmatmul.f32.gmra.mxu0 %v20
  %v58 = vpop.f32.mrf.mxu0
  %v59 = vadd.f32 %v39, %v58
  %60 = vdwg.mxu0
  %v61 = vmax.f32 %v59, 0.0
  %v62 = vld [vmem:[%s3] sm:$0xff]
  %v63 = vld [vmem:[%s3 + $0x8] sm:$0xff]
  %v64 = vld [vmem:[%s3 + $0x10] sm:$0xff]
  %v65 = vld [vmem:[%s3 + $0x18] sm:$0xff]
  %v66 = vld [vmem:[%s3 + $0x20] sm:$0xff]
  %v67 = vld [vmem:[%s3 + $0x28] sm:$0xff]
  %v68 = vld [vmem:[%s3 + $0x30] sm:$0xff]
  %v69 = vld [vmem:[%s3 + $0x38] sm:$0xff]
  %v70 = vld [vmem:[%s3 + $0x40] sm:$0xff]
  %v71 = vld [vmem:[%s3 + $0x48] sm:$0xff]
  %v72 = vld [vmem:[%s3 + $0x50] sm:$0xff]
  %v73 = vld [vmem:[%s3 + $0x58] sm:$0xff]
  %v74 = vld [vmem:[%s3 + $0x60] sm:$0xff]
  %v75 = vld [vmem:[%s3 + $0x68] sm:$0xff]
  %v76 = vld [vmem:[%s3 + $0x70] sm:$0xff]
  %v77 = vld [vmem:[%s3 + $0x78] sm:$0xff]
  %v78 = vld [vmem:[%s4] sm:$0x1]
  %v80 = vperm.slane %v78, 0
  %82 = vmatpush.msra.mxu0 %v77
  %83 = vmatpush.msra.mxu0 %v76
  %84 = vmatpush.msra.mxu0 %v75
  %85 = vmatpush.msra.mxu0 %v74
  %86 = vmatpush.msra.mxu0 %v73
  %87 = vmatpush.msra.mxu0 %v72
  %88 = vmatpush.msra.mxu0 %v71
  %89 = vmatpush.msra.mxu0 %v70
  %90 = vmatpush.msra.mxu0 %v69
  %91 = vmatpush.msra.mxu0 %v68
  %92 = vmatpush.msra.mxu0 %v67
  %93 = vmatpush.msra.mxu0 %v66
  %94 = vmatpush.msra.mxu0 %v65
  %95 = vmatpush.msra.mxu0 %v64
  %96 = vmatpush.msra.mxu0 %v63
  %97 = vmatpush.msra.mxu0 %v62
  %98 = vmatmul.f32.gmra.mxu0 %v61
  %v99 = vpop.f32.mrf.mxu0
  %v100 = vadd.f32 %v80, %v99
  %101 = vdwg.mxu0
  %102 = vst [vmem:[%s5] sm:$0xff] %v100
  // Predicated region
  $region22: #{i2bgnn_forward.5} parent=0 // pred_check
    _
  $region23: #{i2bgnn_forward.5} parent=0 // pred_check_branch
    %104 = sbr.rel (0) target = $region25
  $region24: #{i2bgnn_forward.5} parent=0 // pred_region
    _
  $region25: #{i2bgnn_forward.5} parent=0 // pred_fallthru
    _
  // Predicated region
  $region26: #{i2bgnn_forward.5} parent=0 // pred_check
    _
  $region27: #{i2bgnn_forward.5} parent=0 // pred_check_branch
    %106 = sbr.rel (0) target = $region29
  $region28: #{i2bgnn_forward.5} parent=0 // pred_region
    _
  $region29: #{i2bgnn_forward.5} parent=0 // pred_fallthru
    _

// kernel: i2bgnn_forward.3
$region0: #{i2bgnn_forward.3}
  #allocation0 [shape = 'u32[]', space=smem, size = 0x4, offset = 0x4, fixed_abs, tag = 'smem constant byte address 0x4 - core index']
  #allocation1 [shape = 'u32[72,128]{1,0:T(1,128)}', space=vmem, size = 0x9000, scoped, tag = 'internal scratch']
  %s0 = inlined_call_operand.vmem [shape: bf16[128,128], index: 0, kind: input, shape index: {}]
  %s1 = inlined_call_operand.vmem [shape: bf16[128,128], index: 1, kind: input, shape index: {}]
  %s2 = inlined_call_operand.vmem [shape: bf16[128,128], index: 2, kind: input, shape index: {}]
  %s3 = inlined_call_operand.vmem [shape: f32[1,128], index: 3, kind: input, shape index: {}]
  %s4 = inlined_call_operand.vmem [shape: f32[1,128], index: 4, kind: input, shape index: {}]
  %s5 = inlined_call_operand.vmem [shape: f32[1,128], index: 5, kind: input, shape index: {}]
  %s6 = inlined_call_operand.vmem [shape: bf16[128,128], index: 6, kind: output, shape index: {}]
  %s7 = sld [smem:[#allocation0]]
  $region34: #{i2bgnn_forward.3} parent=0
    _
  %s9 = ssub.s32 1, %s7
  %s10 = scalar_select 0, %s9, %s7
  // Predicated region
  $region2: #{i2bgnn_forward.3} parent=0 // pred_check
    _
  $region3: #{i2bgnn_forward.3} parent=0 // pred_check_branch
    %12 = sbr.rel (0) target = $region5
  $region4: #{i2bgnn_forward.3} parent=0 // pred_region
    _
  $region5: #{i2bgnn_forward.3} parent=0 // pred_fallthru
    _
  // Predicated region
  $region6: #{i2bgnn_forward.3} parent=0 // pred_check
    _
  $region7: #{i2bgnn_forward.3} parent=0 // pred_check_branch
    %14 = sbr.rel (0) target = $region9
  $region8: #{i2bgnn_forward.3} parent=0 // pred_region
    _
  $region9: #{i2bgnn_forward.3} parent=0 // pred_fallthru
    _
  // Predicated region
  $region10: #{i2bgnn_forward.3} parent=0 // pred_check
    _
  $region11: #{i2bgnn_forward.3} parent=0 // pred_check_branch
    %16 = sbr.rel (0) target = $region13
  $region12: #{i2bgnn_forward.3} parent=0 // pred_region
    _
  $region13: #{i2bgnn_forward.3} parent=0 // pred_fallthru
    _
  // Predicated region
  $region14: #{i2bgnn_forward.3} parent=0 // pred_check
    _
  $region15: #{i2bgnn_forward.3} parent=0 // pred_check_branch
    %18 = sbr.rel (0) target = $region17
  $region16: #{i2bgnn_forward.3} parent=0 // pred_region
    _
  $region17: #{i2bgnn_forward.3} parent=0 // pred_fallthru
    _
  // Predicated region
  $region18: #{i2bgnn_forward.3} parent=0 // pred_check
    _
  $region19: #{i2bgnn_forward.3} parent=0 // pred_check_branch
    %20 = sbr.rel (0) target = $region21
  $region20: #{i2bgnn_forward.3} parent=0 // pred_region
    _
  $region21: #{i2bgnn_forward.3} parent=0 // pred_fallthru
    _
  // Predicated region
  $region22: #{i2bgnn_forward.3} parent=0 // pred_check
    _
  $region23: #{i2bgnn_forward.3} parent=0 // pred_check_branch
    %22 = sbr.rel (0) target = $region25
  $region24: #{i2bgnn_forward.3} parent=0 // pred_region
    _
  $region25: #{i2bgnn_forward.3} parent=0 // pred_fallthru
    _
  %v23 = vld [vmem:[%s0] sm:$0xf]
  %v24 = vld [vmem:[%s0 + $0x4] sm:$0xf]
  %v25 = vld [vmem:[%s0 + $0x8] sm:$0xf]
  %v26 = vld [vmem:[%s0 + $0xc] sm:$0xf]
  %v27 = vld [vmem:[%s0 + $0x10] sm:$0xf]
  %v28 = vld [vmem:[%s0 + $0x14] sm:$0xf]
  %v29 = vld [vmem:[%s0 + $0x18] sm:$0xf]
  %v30 = vld [vmem:[%s0 + $0x1c] sm:$0xf]
  %v31 = vld [vmem:[%s0 + $0x20] sm:$0xf]
  %v32 = vld [vmem:[%s0 + $0x24] sm:$0xf]
  %v33 = vld [vmem:[%s0 + $0x28] sm:$0xf]
  %v34 = vld [vmem:[%s0 + $0x2c] sm:$0xf]
  %v35 = vld [vmem:[%s0 + $0x30] sm:$0xf]
  %v36 = vld [vmem:[%s0 + $0x34] sm:$0xf]
  %v37 = vld [vmem:[%s0 + $0x38] sm:$0xf]
  %v38 = vld [vmem:[%s0 + $0x3c] sm:$0xf]
  %v39 = vld [vmem:[%s1] sm:$0xf]
  %v40 = vld [vmem:[%s1 + $0x4] sm:$0xf]
  %v41 = vld [vmem:[%s1 + $0x8] sm:$0xf]
  %v42 = vld [vmem:[%s1 + $0xc] sm:$0xf]
  %v43 = vld [vmem:[%s1 + $0x10] sm:$0xf]
  %v44 = vld [vmem:[%s1 + $0x14] sm:$0xf]
  %v45 = vld [vmem:[%s1 + $0x18] sm:$0xf]
  %v46 = vld [vmem:[%s1 + $0x1c] sm:$0xf]
  %v47 = vld [vmem:[%s1 + $0x20] sm:$0xf]
  %v48 = vld [vmem:[%s1 + $0x24] sm:$0xf]
  %v49 = vld [vmem:[%s1 + $0x28] sm:$0xf]
  %v50 = vld [vmem:[%s1 + $0x2c] sm:$0xf]
  %v51 = vld [vmem:[%s1 + $0x30] sm:$0xf]
  %v52 = vld [vmem:[%s1 + $0x34] sm:$0xf]
  %v53 = vld [vmem:[%s1 + $0x38] sm:$0xf]
  %v54 = vld [vmem:[%s1 + $0x3c] sm:$0xf]
  %v71 = vunpack.c.l.b16 %v23
  %v72 = vunpack.c.l.b16 %v24
  %v73 = vunpack.c.l.b16 %v25
  %v74 = vunpack.c.l.b16 %v26
  %v75 = vunpack.c.l.b16 %v27
  %v76 = vunpack.c.l.b16 %v28
  %v77 = vunpack.c.l.b16 %v29
  %v78 = vunpack.c.l.b16 %v30
  %v79 = vunpack.c.l.b16 %v31
  %v80 = vunpack.c.l.b16 %v32
  %v81 = vunpack.c.l.b16 %v33
  %v82 = vunpack.c.l.b16 %v34
  %v83 = vunpack.c.l.b16 %v35
  %v84 = vunpack.c.l.b16 %v36
  %v85 = vunpack.c.l.b16 %v37
  %v86 = vunpack.c.l.b16 %v38
  %v87 = vpack.c.b16 %v72, %v71
  %v88 = vpack.c.b16 %v74, %v73
  %v89 = vpack.c.b16 %v76, %v75
  %v90 = vpack.c.b16 %v78, %v77
  %v91 = vpack.c.b16 %v80, %v79
  %v92 = vpack.c.b16 %v82, %v81
  %v93 = vpack.c.b16 %v84, %v83
  %v94 = vpack.c.b16 %v86, %v85
  %v119 = vunpack.c.l.b16 %v39
  %v120 = vunpack.c.l.b16 %v40
  %v121 = vunpack.c.l.b16 %v41
  %v122 = vunpack.c.l.b16 %v42
  %v123 = vunpack.c.l.b16 %v43
  %v124 = vunpack.c.l.b16 %v44
  %v125 = vunpack.c.l.b16 %v45
  %v126 = vunpack.c.l.b16 %v46
  %v127 = vunpack.c.l.b16 %v47
  %v128 = vunpack.c.l.b16 %v48
  %v129 = vunpack.c.l.b16 %v49
  %v130 = vunpack.c.l.b16 %v50
  %v131 = vunpack.c.l.b16 %v51
  %v132 = vunpack.c.l.b16 %v52
  %v133 = vunpack.c.l.b16 %v53
  %v134 = vunpack.c.l.b16 %v54
  %v135 = vpack.c.b16 %v120, %v119
  %v136 = vpack.c.b16 %v122, %v121
  %v137 = vpack.c.b16 %v124, %v123
  %v138 = vpack.c.b16 %v126, %v125
  %v139 = vpack.c.b16 %v128, %v127
  %v140 = vpack.c.b16 %v130, %v129
  %v141 = vpack.c.b16 %v132, %v131
  %v142 = vpack.c.b16 %v134, %v133
  %151 = vmatpush.bf16.msra.mxu0 %v142
  %152 = vmatpush.bf16.msra.mxu0 %v141
  %153 = vmatpush.bf16.msra.mxu0 %v140
  %154 = vmatpush.bf16.msra.mxu0 %v139
  %155 = vmatpush.bf16.msra.mxu0 %v138
  %156 = vmatpush.bf16.msra.mxu0 %v137
  %157 = vmatpush.bf16.msra.mxu0 %v136
  %158 = vmatpush.bf16.msra.mxu0 %v135
  %159 = vmatmul.bf16.gmra.mxu0 %v87
  %v160 = vpop.f32.mrf.mxu0
  %v161 = vadd.f32 0.0, %v160
  %v162 = vpop.f32.mrf.mxu0
  %v163 = vadd.f32 0.0, %v162
  %164 = vmatmul.bf16.gmra.mxu0 %v88
  %v165 = vpop.f32.mrf.mxu0
  %v166 = vadd.f32 0.0, %v165
  %v167 = vpop.f32.mrf.mxu0
  %v168 = vadd.f32 0.0, %v167
  %169 = vmatmul.bf16.gmra.mxu0 %v89
  %v170 = vpop.f32.mrf.mxu0
  %v171 = vadd.f32 0.0, %v170
  %v172 = vpop.f32.mrf.mxu0
  %v173 = vadd.f32 0.0, %v172
  %174 = vmatmul.bf16.gmra.mxu0 %v90
  %v175 = vpop.f32.mrf.mxu0
  %v176 = vadd.f32 0.0, %v175
  %v177 = vpop.f32.mrf.mxu0
  %v178 = vadd.f32 0.0, %v177
  %179 = vmatmul.bf16.gmra.mxu0 %v91
  %v180 = vpop.f32.mrf.mxu0
  %v181 = vadd.f32 0.0, %v180
  %v182 = vpop.f32.mrf.mxu0
  %v183 = vadd.f32 0.0, %v182
  %184 = vmatmul.bf16.gmra.mxu0 %v92
  %v185 = vpop.f32.mrf.mxu0
  %v186 = vadd.f32 0.0, %v185
  %v187 = vpop.f32.mrf.mxu0
  %v188 = vadd.f32 0.0, %v187
  %189 = vmatmul.bf16.gmra.mxu0 %v93
  %v190 = vpop.f32.mrf.mxu0
  %v191 = vadd.f32 0.0, %v190
  %v192 = vpop.f32.mrf.mxu0
  %v193 = vadd.f32 0.0, %v192
  %194 = vmatmul.bf16.gmra.mxu0 %v94
  %v195 = vpop.f32.mrf.mxu0
  %v196 = vadd.f32 0.0, %v195
  %v197 = vpop.f32.mrf.mxu0
  %v198 = vadd.f32 0.0, %v197
  %199 = vdwg.mxu0
  %v200 = vpack.c.bf16 %v163, %v161
  %v201 = vpack.c.bf16 %v168, %v166
  %v202 = vpack.c.bf16 %v173, %v171
  %v203 = vpack.c.bf16 %v178, %v176
  %v204 = vpack.c.bf16 %v183, %v181
  %v205 = vpack.c.bf16 %v188, %v186
  %v206 = vpack.c.bf16 %v193, %v191
  %v207 = vpack.c.bf16 %v198, %v196
  %v208 = vld [vmem:[%s2] sm:$0xf]
  %v209 = vld [vmem:[%s2 + $0x4] sm:$0xf]
  %v210 = vld [vmem:[%s2 + $0x8] sm:$0xf]
  %v211 = vld [vmem:[%s2 + $0xc] sm:$0xf]
  %v212 = vld [vmem:[%s2 + $0x10] sm:$0xf]
  %v213 = vld [vmem:[%s2 + $0x14] sm:$0xf]
  %v214 = vld [vmem:[%s2 + $0x18] sm:$0xf]
  %v215 = vld [vmem:[%s2 + $0x1c] sm:$0xf]
  %v216 = vld [vmem:[%s2 + $0x20] sm:$0xf]
  %v217 = vld [vmem:[%s2 + $0x24] sm:$0xf]
  %v218 = vld [vmem:[%s2 + $0x28] sm:$0xf]
  %v219 = vld [vmem:[%s2 + $0x2c] sm:$0xf]
  %v220 = vld [vmem:[%s2 + $0x30] sm:$0xf]
  %v221 = vld [vmem:[%s2 + $0x34] sm:$0xf]
  %v222 = vld [vmem:[%s2 + $0x38] sm:$0xf]
  %v223 = vld [vmem:[%s2 + $0x3c] sm:$0xf]
  %v224 = vld [vmem:[%s3] sm:$0x1]
  %v226 = vperm.slane %v224, 0
  %v244 = vunpack.c.l.b16 %v208
  %v245 = vunpack.c.l.b16 %v209
  %v246 = vunpack.c.l.b16 %v210
  %v247 = vunpack.c.l.b16 %v211
  %v248 = vunpack.c.l.b16 %v212
  %v249 = vunpack.c.l.b16 %v213
  %v250 = vunpack.c.l.b16 %v214
  %v251 = vunpack.c.l.b16 %v215
  %v252 = vunpack.c.l.b16 %v216
  %v253 = vunpack.c.l.b16 %v217
  %v254 = vunpack.c.l.b16 %v218
  %v255 = vunpack.c.l.b16 %v219
  %v256 = vunpack.c.l.b16 %v220
  %v257 = vunpack.c.l.b16 %v221
  %v258 = vunpack.c.l.b16 %v222
  %v259 = vunpack.c.l.b16 %v223
  %v260 = vpack.c.b16 %v245, %v244
  %v261 = vpack.c.b16 %v247, %v246
  %v262 = vpack.c.b16 %v249, %v248
  %v263 = vpack.c.b16 %v251, %v250
  %v264 = vpack.c.b16 %v253, %v252
  %v265 = vpack.c.b16 %v255, %v254
  %v266 = vpack.c.b16 %v257, %v256
  %v267 = vpack.c.b16 %v259, %v258
  %276 = vmatpush.bf16.msra.mxu0 %v267
  %277 = vmatpush.bf16.msra.mxu0 %v266
  %278 = vmatpush.bf16.msra.mxu0 %v265
  %279 = vmatpush.bf16.msra.mxu0 %v264
  %280 = vmatpush.bf16.msra.mxu0 %v263
  %281 = vmatpush.bf16.msra.mxu0 %v262
  %282 = vmatpush.bf16.msra.mxu0 %v261
  %283 = vmatpush.bf16.msra.mxu0 %v260
  %284 = vmatmul.bf16.gmra.mxu0 %v200
  %v285 = vpop.f32.mrf.mxu0
  %v286 = vadd.f32 %v226, %v285
  %v287 = vpop.f32.mrf.mxu0
  %v288 = vadd.f32 %v226, %v287
  %289 = vmatmul.bf16.gmra.mxu0 %v201
  %v290 = vpop.f32.mrf.mxu0
  %v291 = vadd.f32 %v226, %v290
  %v292 = vpop.f32.mrf.mxu0
  %v293 = vadd.f32 %v226, %v292
  %294 = vmatmul.bf16.gmra.mxu0 %v202
  %v295 = vpop.f32.mrf.mxu0
  %v296 = vadd.f32 %v226, %v295
  %v297 = vpop.f32.mrf.mxu0
  %v298 = vadd.f32 %v226, %v297
  %299 = vmatmul.bf16.gmra.mxu0 %v203
  %v300 = vpop.f32.mrf.mxu0
  %v301 = vadd.f32 %v226, %v300
  %v302 = vpop.f32.mrf.mxu0
  %v303 = vadd.f32 %v226, %v302
  %304 = vmatmul.bf16.gmra.mxu0 %v204
  %v305 = vpop.f32.mrf.mxu0
  %v306 = vadd.f32 %v226, %v305
  %v307 = vpop.f32.mrf.mxu0
  %v308 = vadd.f32 %v226, %v307
  %309 = vmatmul.bf16.gmra.mxu0 %v205
  %v310 = vpop.f32.mrf.mxu0
  %v311 = vadd.f32 %v226, %v310
  %v312 = vpop.f32.mrf.mxu0
  %v313 = vadd.f32 %v226, %v312
  %314 = vmatmul.bf16.gmra.mxu0 %v206
  %v315 = vpop.f32.mrf.mxu0
  %v316 = vadd.f32 %v226, %v315
  %v317 = vpop.f32.mrf.mxu0
  %v318 = vadd.f32 %v226, %v317
  %319 = vmatmul.bf16.gmra.mxu0 %v207
  %v320 = vpop.f32.mrf.mxu0
  %v321 = vadd.f32 %v226, %v320
  %v322 = vpop.f32.mrf.mxu0
  %v323 = vadd.f32 %v226, %v322
  %324 = vdwg.mxu0
  %v325 = vmax.f32 %v286, 0.0
  %v326 = vmax.f32 %v288, 0.0
  %v327 = vmax.f32 %v291, 0.0
  %v328 = vmax.f32 %v293, 0.0
  %v329 = vmax.f32 %v296, 0.0
  %v330 = vmax.f32 %v298, 0.0
  %v331 = vmax.f32 %v301, 0.0
  %v332 = vmax.f32 %v303, 0.0
  %v333 = vmax.f32 %v306, 0.0
  %v334 = vmax.f32 %v308, 0.0
  %v335 = vmax.f32 %v311, 0.0
  %v336 = vmax.f32 %v313, 0.0
  %v337 = vmax.f32 %v316, 0.0
  %v338 = vmax.f32 %v318, 0.0
  %v339 = vmax.f32 %v321, 0.0
  %v340 = vmax.f32 %v323, 0.0
  %v341 = vld [vmem:[%s4] sm:$0x1]
  %v343 = vperm.slane %v341, 0
  %v345 = vmul.f32 %v325, %v343
  %v346 = vmul.f32 %v326, %v343
  %v347 = vmul.f32 %v327, %v343
  %v348 = vmul.f32 %v328, %v343
  %v349 = vmul.f32 %v329, %v343
  %v350 = vmul.f32 %v330, %v343
  %v351 = vmul.f32 %v331, %v343
  %v352 = vmul.f32 %v332, %v343
  %v353 = vmul.f32 %v333, %v343
  %v354 = vmul.f32 %v334, %v343
  %v355 = vmul.f32 %v335, %v343
  %v356 = vmul.f32 %v336, %v343
  %v357 = vmul.f32 %v337, %v343
  %v358 = vmul.f32 %v338, %v343
  %v359 = vmul.f32 %v339, %v343
  %v360 = vmul.f32 %v340, %v343
  %v361 = vld [vmem:[%s5] sm:$0x1]
  %v363 = vperm.slane %v361, 0
  %v365 = vadd.f32 %v345, %v363
  %v366 = vadd.f32 %v346, %v363
  %v367 = vadd.f32 %v347, %v363
  %v368 = vadd.f32 %v348, %v363
  %v369 = vadd.f32 %v349, %v363
  %v370 = vadd.f32 %v350, %v363
  %v371 = vadd.f32 %v351, %v363
  %v372 = vadd.f32 %v352, %v363
  %v373 = vadd.f32 %v353, %v363
  %v374 = vadd.f32 %v354, %v363
  %v375 = vadd.f32 %v355, %v363
  %v376 = vadd.f32 %v356, %v363
  %v377 = vadd.f32 %v357, %v363
  %v378 = vadd.f32 %v358, %v363
  %v379 = vadd.f32 %v359, %v363
  %v380 = vadd.f32 %v360, %v363
  %v381 = vpack.c.bf16 %v365, %v365
  %v382 = vpack.c.bf16 %v366, %v366
  %v383 = vpack.c.bf16 %v367, %v367
  %v384 = vpack.c.bf16 %v368, %v368
  %v385 = vpack.c.bf16 %v369, %v369
  %v386 = vpack.c.bf16 %v370, %v370
  %v387 = vpack.c.bf16 %v371, %v371
  %v388 = vpack.c.bf16 %v372, %v372
  %v389 = vpack.c.bf16 %v373, %v373
  %v390 = vpack.c.bf16 %v374, %v374
  %v391 = vpack.c.bf16 %v375, %v375
  %v392 = vpack.c.bf16 %v376, %v376
  %v393 = vpack.c.bf16 %v377, %v377
  %v394 = vpack.c.bf16 %v378, %v378
  %v395 = vpack.c.bf16 %v379, %v379
  %v396 = vpack.c.bf16 %v380, %v380
  %397 = vst [vmem:[%s6] sm:$0xf] %v381
  %398 = vst [vmem:[%s6 + $0x4] sm:$0xf] %v382
  %399 = vst [vmem:[%s6 + $0x8] sm:$0xf] %v383
  %400 = vst [vmem:[%s6 + $0xc] sm:$0xf] %v384
  %401 = vst [vmem:[%s6 + $0x10] sm:$0xf] %v385
  %402 = vst [vmem:[%s6 + $0x14] sm:$0xf] %v386
  %403 = vst [vmem:[%s6 + $0x18] sm:$0xf] %v387
  %404 = vst [vmem:[%s6 + $0x1c] sm:$0xf] %v388
  %405 = vst [vmem:[%s6 + $0x20] sm:$0xf] %v389
  %406 = vst [vmem:[%s6 + $0x24] sm:$0xf] %v390
  %407 = vst [vmem:[%s6 + $0x28] sm:$0xf] %v391
  %408 = vst [vmem:[%s6 + $0x2c] sm:$0xf] %v392
  %409 = vst [vmem:[%s6 + $0x30] sm:$0xf] %v393
  %410 = vst [vmem:[%s6 + $0x34] sm:$0xf] %v394
  %411 = vst [vmem:[%s6 + $0x38] sm:$0xf] %v395
  %412 = vst [vmem:[%s6 + $0x3c] sm:$0xf] %v396
  // Predicated region
  $region26: #{i2bgnn_forward.3} parent=0 // pred_check
    _
  $region27: #{i2bgnn_forward.3} parent=0 // pred_check_branch
    %414 = sbr.rel (0) target = $region29
  $region28: #{i2bgnn_forward.3} parent=0 // pred_region
    _
  $region29: #{i2bgnn_forward.3} parent=0 // pred_fallthru
    _
  // Predicated region
  $region30: #{i2bgnn_forward.3} parent=0 // pred_check
    _
  $region31: #{i2bgnn_forward.3} parent=0 // pred_check_branch
    %416 = sbr.rel (0) target = $region33
  $region32: #{i2bgnn_forward.3} parent=0 // pred_region
    _
  $region33: #{i2bgnn_forward.3} parent=0 // pred_fallthru
    _

// kernel: i2bgnn_forward.4
$region0: #{i2bgnn_forward.4}
  #allocation0 [shape = 'u32[]', space=smem, size = 0x4, offset = 0x4, fixed_abs, tag = 'smem constant byte address 0x4 - core index']
  #allocation1 [shape = 'u32[72,128]{1,0:T(1,128)}', space=vmem, size = 0x9000, scoped, tag = 'internal scratch']
  %s0 = inlined_call_operand.vmem [shape: bf16[128,128], index: 0, kind: input, shape index: {}]
  %s1 = inlined_call_operand.vmem [shape: bf16[128,128], index: 1, kind: input, shape index: {}]
  %s2 = inlined_call_operand.vmem [shape: f32[8,128], index: 2, kind: input, shape index: {}]
  %s3 = inlined_call_operand.vmem [shape: bf16[128,128], index: 3, kind: input, shape index: {}]
  %s4 = inlined_call_operand.vmem [shape: f32[1,128], index: 4, kind: input, shape index: {}]
  %s5 = inlined_call_operand.vmem [shape: bf16[128,128], index: 5, kind: input, shape index: {}]
  %s6 = inlined_call_operand.vmem [shape: f32[1,128], index: 6, kind: input, shape index: {}]
  %s7 = inlined_call_operand.vmem [shape: bf16[128,128], index: 7, kind: input, shape index: {}]
  %s8 = inlined_call_operand.vmem [shape: f32[1,128], index: 8, kind: input, shape index: {}]
  %s9 = inlined_call_operand.vmem [shape: f32[128,128], index: 9, kind: output, shape index: {0}]
  %s10 = inlined_call_operand.vmem [shape: f32[1,8,128], index: 10, kind: output, shape index: {1}]
  %11 = xla_tuple %s9, %s10
  %s12 = sld [smem:[#allocation0]]
  $region54: #{i2bgnn_forward.4} parent=0
    _
  %s14 = ssub.s32 1, %s12
  %s15 = scalar_select 0, %s14, %s12
  // Predicated region
  $region2: #{i2bgnn_forward.4} parent=0 // pred_check
    _
  $region3: #{i2bgnn_forward.4} parent=0 // pred_check_branch
    %17 = sbr.rel (0) target = $region5
  $region4: #{i2bgnn_forward.4} parent=0 // pred_region
    _
  $region5: #{i2bgnn_forward.4} parent=0 // pred_fallthru
    _
  // Predicated region
  $region6: #{i2bgnn_forward.4} parent=0 // pred_check
    _
  $region7: #{i2bgnn_forward.4} parent=0 // pred_check_branch
    %19 = sbr.rel (0) target = $region9
  $region8: #{i2bgnn_forward.4} parent=0 // pred_region
    _
  $region9: #{i2bgnn_forward.4} parent=0 // pred_fallthru
    _
  // Predicated region
  $region10: #{i2bgnn_forward.4} parent=0 // pred_check
    _
  $region11: #{i2bgnn_forward.4} parent=0 // pred_check_branch
    %21 = sbr.rel (0) target = $region13
  $region12: #{i2bgnn_forward.4} parent=0 // pred_region
    _
  $region13: #{i2bgnn_forward.4} parent=0 // pred_fallthru
    _
  // Predicated region
  $region14: #{i2bgnn_forward.4} parent=0 // pred_check
    _
  $region15: #{i2bgnn_forward.4} parent=0 // pred_check_branch
    %23 = sbr.rel (0) target = $region17
  $region16: #{i2bgnn_forward.4} parent=0 // pred_region
    _
  $region17: #{i2bgnn_forward.4} parent=0 // pred_fallthru
    _
  // Predicated region
  $region18: #{i2bgnn_forward.4} parent=0 // pred_check
    _
  $region19: #{i2bgnn_forward.4} parent=0 // pred_check_branch
    %25 = sbr.rel (0) target = $region21
  $region20: #{i2bgnn_forward.4} parent=0 // pred_region
    _
  $region21: #{i2bgnn_forward.4} parent=0 // pred_fallthru
    _
  // Predicated region
  $region22: #{i2bgnn_forward.4} parent=0 // pred_check
    _
  $region23: #{i2bgnn_forward.4} parent=0 // pred_check_branch
    %27 = sbr.rel (0) target = $region25
  $region24: #{i2bgnn_forward.4} parent=0 // pred_region
    _
  $region25: #{i2bgnn_forward.4} parent=0 // pred_fallthru
    _
  // Predicated region
  $region26: #{i2bgnn_forward.4} parent=0 // pred_check
    _
  $region27: #{i2bgnn_forward.4} parent=0 // pred_check_branch
    %29 = sbr.rel (0) target = $region29
  $region28: #{i2bgnn_forward.4} parent=0 // pred_region
    _
  $region29: #{i2bgnn_forward.4} parent=0 // pred_fallthru
    _
  // Predicated region
  $region30: #{i2bgnn_forward.4} parent=0 // pred_check
    _
  $region31: #{i2bgnn_forward.4} parent=0 // pred_check_branch
    %31 = sbr.rel (0) target = $region33
  $region32: #{i2bgnn_forward.4} parent=0 // pred_region
    _
  $region33: #{i2bgnn_forward.4} parent=0 // pred_fallthru
    _
  // Predicated region
  $region34: #{i2bgnn_forward.4} parent=0 // pred_check
    _
  $region35: #{i2bgnn_forward.4} parent=0 // pred_check_branch
    %33 = sbr.rel (0) target = $region37
  $region36: #{i2bgnn_forward.4} parent=0 // pred_region
    _
  $region37: #{i2bgnn_forward.4} parent=0 // pred_fallthru
    _
  %v34 = vld [vmem:[%s0] sm:$0xf]
  %v35 = vld [vmem:[%s0 + $0x4] sm:$0xf]
  %v36 = vld [vmem:[%s0 + $0x8] sm:$0xf]
  %v37 = vld [vmem:[%s0 + $0xc] sm:$0xf]
  %v38 = vld [vmem:[%s0 + $0x10] sm:$0xf]
  %v39 = vld [vmem:[%s0 + $0x14] sm:$0xf]
  %v40 = vld [vmem:[%s0 + $0x18] sm:$0xf]
  %v41 = vld [vmem:[%s0 + $0x1c] sm:$0xf]
  %v42 = vld [vmem:[%s0 + $0x20] sm:$0xf]
  %v43 = vld [vmem:[%s0 + $0x24] sm:$0xf]
  %v44 = vld [vmem:[%s0 + $0x28] sm:$0xf]
  %v45 = vld [vmem:[%s0 + $0x2c] sm:$0xf]
  %v46 = vld [vmem:[%s0 + $0x30] sm:$0xf]
  %v47 = vld [vmem:[%s0 + $0x34] sm:$0xf]
  %v48 = vld [vmem:[%s0 + $0x38] sm:$0xf]
  %v49 = vld [vmem:[%s0 + $0x3c] sm:$0xf]
  %v50 = vld [vmem:[%s1] sm:$0xf]
  %v51 = vld [vmem:[%s1 + $0x4] sm:$0xf]
  %v52 = vld [vmem:[%s1 + $0x8] sm:$0xf]
  %v53 = vld [vmem:[%s1 + $0xc] sm:$0xf]
  %v54 = vld [vmem:[%s1 + $0x10] sm:$0xf]
  %v55 = vld [vmem:[%s1 + $0x14] sm:$0xf]
  %v56 = vld [vmem:[%s1 + $0x18] sm:$0xf]
  %v57 = vld [vmem:[%s1 + $0x1c] sm:$0xf]
  %v58 = vld [vmem:[%s1 + $0x20] sm:$0xf]
  %v59 = vld [vmem:[%s1 + $0x24] sm:$0xf]
  %v60 = vld [vmem:[%s1 + $0x28] sm:$0xf]
  %v61 = vld [vmem:[%s1 + $0x2c] sm:$0xf]
  %v62 = vld [vmem:[%s1 + $0x30] sm:$0xf]
  %v63 = vld [vmem:[%s1 + $0x34] sm:$0xf]
  %v64 = vld [vmem:[%s1 + $0x38] sm:$0xf]
  %v65 = vld [vmem:[%s1 + $0x3c] sm:$0xf]
  %v82 = vunpack.c.l.b16 %v34
  %v83 = vunpack.c.l.b16 %v35
  %v84 = vunpack.c.l.b16 %v36
  %v85 = vunpack.c.l.b16 %v37
  %v86 = vunpack.c.l.b16 %v38
  %v87 = vunpack.c.l.b16 %v39
  %v88 = vunpack.c.l.b16 %v40
  %v89 = vunpack.c.l.b16 %v41
  %v90 = vunpack.c.l.b16 %v42
  %v91 = vunpack.c.l.b16 %v43
  %v92 = vunpack.c.l.b16 %v44
  %v93 = vunpack.c.l.b16 %v45
  %v94 = vunpack.c.l.b16 %v46
  %v95 = vunpack.c.l.b16 %v47
  %v96 = vunpack.c.l.b16 %v48
  %v97 = vunpack.c.l.b16 %v49
  %v98 = vpack.c.b16 %v83, %v82
  %v99 = vpack.c.b16 %v85, %v84
  %v100 = vpack.c.b16 %v87, %v86
  %v101 = vpack.c.b16 %v89, %v88
  %v102 = vpack.c.b16 %v91, %v90
  %v103 = vpack.c.b16 %v93, %v92
  %v104 = vpack.c.b16 %v95, %v94
  %v105 = vpack.c.b16 %v97, %v96
  %v130 = vunpack.c.l.b16 %v50
  %v131 = vunpack.c.l.b16 %v51
  %v132 = vunpack.c.l.b16 %v52
  %v133 = vunpack.c.l.b16 %v53
  %v134 = vunpack.c.l.b16 %v54
  %v135 = vunpack.c.l.b16 %v55
  %v136 = vunpack.c.l.b16 %v56
  %v137 = vunpack.c.l.b16 %v57
  %v138 = vunpack.c.l.b16 %v58
  %v139 = vunpack.c.l.b16 %v59
  %v140 = vunpack.c.l.b16 %v60
  %v141 = vunpack.c.l.b16 %v61
  %v142 = vunpack.c.l.b16 %v62
  %v143 = vunpack.c.l.b16 %v63
  %v144 = vunpack.c.l.b16 %v64
  %v145 = vunpack.c.l.b16 %v65
  %v146 = vpack.c.b16 %v131, %v130
  %v147 = vpack.c.b16 %v133, %v132
  %v148 = vpack.c.b16 %v135, %v134
  %v149 = vpack.c.b16 %v137, %v136
  %v150 = vpack.c.b16 %v139, %v138
  %v151 = vpack.c.b16 %v141, %v140
  %v152 = vpack.c.b16 %v143, %v142
  %v153 = vpack.c.b16 %v145, %v144
  %162 = vmatpush.bf16.msra.mxu0 %v153
  %163 = vmatpush.bf16.msra.mxu0 %v152
  %164 = vmatpush.bf16.msra.mxu0 %v151
  %165 = vmatpush.bf16.msra.mxu0 %v150
  %166 = vmatpush.bf16.msra.mxu0 %v149
  %167 = vmatpush.bf16.msra.mxu0 %v148
  %168 = vmatpush.bf16.msra.mxu0 %v147
  %169 = vmatpush.bf16.msra.mxu0 %v146
  %170 = vmatmul.bf16.gmra.mxu0 %v98
  %v171 = vpop.f32.mrf.mxu0
  %v172 = vadd.f32 0.0, %v171
  %v173 = vpop.f32.mrf.mxu0
  %v174 = vadd.f32 0.0, %v173
  %175 = vmatmul.bf16.gmra.mxu0 %v99
  %v176 = vpop.f32.mrf.mxu0
  %v177 = vadd.f32 0.0, %v176
  %v178 = vpop.f32.mrf.mxu0
  %v179 = vadd.f32 0.0, %v178
  %180 = vmatmul.bf16.gmra.mxu0 %v100
  %v181 = vpop.f32.mrf.mxu0
  %v182 = vadd.f32 0.0, %v181
  %v183 = vpop.f32.mrf.mxu0
  %v184 = vadd.f32 0.0, %v183
  %185 = vmatmul.bf16.gmra.mxu0 %v101
  %v186 = vpop.f32.mrf.mxu0
  %v187 = vadd.f32 0.0, %v186
  %v188 = vpop.f32.mrf.mxu0
  %v189 = vadd.f32 0.0, %v188
  %190 = vmatmul.bf16.gmra.mxu0 %v102
  %v191 = vpop.f32.mrf.mxu0
  %v192 = vadd.f32 0.0, %v191
  %v193 = vpop.f32.mrf.mxu0
  %v194 = vadd.f32 0.0, %v193
  %195 = vmatmul.bf16.gmra.mxu0 %v103
  %v196 = vpop.f32.mrf.mxu0
  %v197 = vadd.f32 0.0, %v196
  %v198 = vpop.f32.mrf.mxu0
  %v199 = vadd.f32 0.0, %v198
  %200 = vmatmul.bf16.gmra.mxu0 %v104
  %v201 = vpop.f32.mrf.mxu0
  %v202 = vadd.f32 0.0, %v201
  %v203 = vpop.f32.mrf.mxu0
  %v204 = vadd.f32 0.0, %v203
  %205 = vmatmul.bf16.gmra.mxu0 %v105
  %v206 = vpop.f32.mrf.mxu0
  %v207 = vadd.f32 0.0, %v206
  %v208 = vpop.f32.mrf.mxu0
  %v209 = vadd.f32 0.0, %v208
  %210 = vdwg.mxu0
  %v211 = vpack.c.bf16 %v174, %v172
  %v212 = vpack.c.bf16 %v179, %v177
  %v213 = vpack.c.bf16 %v184, %v182
  %v214 = vpack.c.bf16 %v189, %v187
  %v215 = vpack.c.bf16 %v194, %v192
  %v216 = vpack.c.bf16 %v199, %v197
  %v217 = vpack.c.bf16 %v204, %v202
  %v218 = vpack.c.bf16 %v209, %v207
  %v219 = vld [vmem:[%s3] sm:$0xf]
  %v220 = vld [vmem:[%s3 + $0x4] sm:$0xf]
  %v221 = vld [vmem:[%s3 + $0x8] sm:$0xf]
  %v222 = vld [vmem:[%s3 + $0xc] sm:$0xf]
  %v223 = vld [vmem:[%s3 + $0x10] sm:$0xf]
  %v224 = vld [vmem:[%s3 + $0x14] sm:$0xf]
  %v225 = vld [vmem:[%s3 + $0x18] sm:$0xf]
  %v226 = vld [vmem:[%s3 + $0x1c] sm:$0xf]
  %v227 = vld [vmem:[%s3 + $0x20] sm:$0xf]
  %v228 = vld [vmem:[%s3 + $0x24] sm:$0xf]
  %v229 = vld [vmem:[%s3 + $0x28] sm:$0xf]
  %v230 = vld [vmem:[%s3 + $0x2c] sm:$0xf]
  %v231 = vld [vmem:[%s3 + $0x30] sm:$0xf]
  %v232 = vld [vmem:[%s3 + $0x34] sm:$0xf]
  %v233 = vld [vmem:[%s3 + $0x38] sm:$0xf]
  %v234 = vld [vmem:[%s3 + $0x3c] sm:$0xf]
  %v235 = vld [vmem:[%s4] sm:$0x1]
  %v237 = vperm.slane %v235, 0
  %v255 = vunpack.c.l.b16 %v219
  %v256 = vunpack.c.l.b16 %v220
  %v257 = vunpack.c.l.b16 %v221
  %v258 = vunpack.c.l.b16 %v222
  %v259 = vunpack.c.l.b16 %v223
  %v260 = vunpack.c.l.b16 %v224
  %v261 = vunpack.c.l.b16 %v225
  %v262 = vunpack.c.l.b16 %v226
  %v263 = vunpack.c.l.b16 %v227
  %v264 = vunpack.c.l.b16 %v228
  %v265 = vunpack.c.l.b16 %v229
  %v266 = vunpack.c.l.b16 %v230
  %v267 = vunpack.c.l.b16 %v231
  %v268 = vunpack.c.l.b16 %v232
  %v269 = vunpack.c.l.b16 %v233
  %v270 = vunpack.c.l.b16 %v234
  %v271 = vpack.c.b16 %v256, %v255
  %v272 = vpack.c.b16 %v258, %v257
  %v273 = vpack.c.b16 %v260, %v259
  %v274 = vpack.c.b16 %v262, %v261
  %v275 = vpack.c.b16 %v264, %v263
  %v276 = vpack.c.b16 %v266, %v265
  %v277 = vpack.c.b16 %v268, %v267
  %v278 = vpack.c.b16 %v270, %v269
  %287 = vmatpush.bf16.msra.mxu0 %v278
  %288 = vmatpush.bf16.msra.mxu0 %v277
  %289 = vmatpush.bf16.msra.mxu0 %v276
  %290 = vmatpush.bf16.msra.mxu0 %v275
  %291 = vmatpush.bf16.msra.mxu0 %v274
  %292 = vmatpush.bf16.msra.mxu0 %v273
  %293 = vmatpush.bf16.msra.mxu0 %v272
  %294 = vmatpush.bf16.msra.mxu0 %v271
  %295 = vmatmul.bf16.gmra.mxu0 %v211
  %v296 = vpop.f32.mrf.mxu0
  %v297 = vadd.f32 %v237, %v296
  %v298 = vpop.f32.mrf.mxu0
  %v299 = vadd.f32 %v237, %v298
  %300 = vmatmul.bf16.gmra.mxu0 %v212
  %v301 = vpop.f32.mrf.mxu0
  %v302 = vadd.f32 %v237, %v301
  %v303 = vpop.f32.mrf.mxu0
  %v304 = vadd.f32 %v237, %v303
  %305 = vmatmul.bf16.gmra.mxu0 %v213
  %v306 = vpop.f32.mrf.mxu0
  %v307 = vadd.f32 %v237, %v306
  %v308 = vpop.f32.mrf.mxu0
  %v309 = vadd.f32 %v237, %v308
  %310 = vmatmul.bf16.gmra.mxu0 %v214
  %v311 = vpop.f32.mrf.mxu0
  %v312 = vadd.f32 %v237, %v311
  %v313 = vpop.f32.mrf.mxu0
  %v314 = vadd.f32 %v237, %v313
  %315 = vmatmul.bf16.gmra.mxu0 %v215
  %v316 = vpop.f32.mrf.mxu0
  %v317 = vadd.f32 %v237, %v316
  %v318 = vpop.f32.mrf.mxu0
  %v319 = vadd.f32 %v237, %v318
  %320 = vmatmul.bf16.gmra.mxu0 %v216
  %v321 = vpop.f32.mrf.mxu0
  %v322 = vadd.f32 %v237, %v321
  %v323 = vpop.f32.mrf.mxu0
  %v324 = vadd.f32 %v237, %v323
  %325 = vmatmul.bf16.gmra.mxu0 %v217
  %v326 = vpop.f32.mrf.mxu0
  %v327 = vadd.f32 %v237, %v326
  %v328 = vpop.f32.mrf.mxu0
  %v329 = vadd.f32 %v237, %v328
  %330 = vmatmul.bf16.gmra.mxu0 %v218
  %v331 = vpop.f32.mrf.mxu0
  %v332 = vadd.f32 %v237, %v331
  %v333 = vpop.f32.mrf.mxu0
  %v334 = vadd.f32 %v237, %v333
  %335 = vdwg.mxu0
  %v336 = vmax.f32 %v297, 0.0
  %v337 = vmax.f32 %v299, 0.0
  %v338 = vmax.f32 %v302, 0.0
  %v339 = vmax.f32 %v304, 0.0
  %v340 = vmax.f32 %v307, 0.0
  %v341 = vmax.f32 %v309, 0.0
  %v342 = vmax.f32 %v312, 0.0
  %v343 = vmax.f32 %v314, 0.0
  %v344 = vmax.f32 %v317, 0.0
  %v345 = vmax.f32 %v319, 0.0
  %v346 = vmax.f32 %v322, 0.0
  %v347 = vmax.f32 %v324, 0.0
  %v348 = vmax.f32 %v327, 0.0
  %v349 = vmax.f32 %v329, 0.0
  %v350 = vmax.f32 %v332, 0.0
  %v351 = vmax.f32 %v334, 0.0
  %v352 = vpack.c.bf16 %v337, %v336
  %v353 = vpack.c.bf16 %v339, %v338
  %v354 = vpack.c.bf16 %v341, %v340
  %v355 = vpack.c.bf16 %v343, %v342
  %v356 = vpack.c.bf16 %v345, %v344
  %v357 = vpack.c.bf16 %v347, %v346
  %v358 = vpack.c.bf16 %v349, %v348
  %v359 = vpack.c.bf16 %v351, %v350
  %v360 = vld [vmem:[%s5] sm:$0xf]
  %v361 = vld [vmem:[%s5 + $0x4] sm:$0xf]
  %v362 = vld [vmem:[%s5 + $0x8] sm:$0xf]
  %v363 = vld [vmem:[%s5 + $0xc] sm:$0xf]
  %v364 = vld [vmem:[%s5 + $0x10] sm:$0xf]
  %v365 = vld [vmem:[%s5 + $0x14] sm:$0xf]
  %v366 = vld [vmem:[%s5 + $0x18] sm:$0xf]
  %v367 = vld [vmem:[%s5 + $0x1c] sm:$0xf]
  %v368 = vld [vmem:[%s5 + $0x20] sm:$0xf]
  %v369 = vld [vmem:[%s5 + $0x24] sm:$0xf]
  %v370 = vld [vmem:[%s5 + $0x28] sm:$0xf]
  %v371 = vld [vmem:[%s5 + $0x2c] sm:$0xf]
  %v372 = vld [vmem:[%s5 + $0x30] sm:$0xf]
  %v373 = vld [vmem:[%s5 + $0x34] sm:$0xf]
  %v374 = vld [vmem:[%s5 + $0x38] sm:$0xf]
  %v375 = vld [vmem:[%s5 + $0x3c] sm:$0xf]
  %v376 = vld [vmem:[%s6] sm:$0x1]
  %v378 = vperm.slane %v376, 0
  %v396 = vunpack.c.l.b16 %v360
  %v397 = vunpack.c.l.b16 %v361
  %v398 = vunpack.c.l.b16 %v362
  %v399 = vunpack.c.l.b16 %v363
  %v400 = vunpack.c.l.b16 %v364
  %v401 = vunpack.c.l.b16 %v365
  %v402 = vunpack.c.l.b16 %v366
  %v403 = vunpack.c.l.b16 %v367
  %v404 = vunpack.c.l.b16 %v368
  %v405 = vunpack.c.l.b16 %v369
  %v406 = vunpack.c.l.b16 %v370
  %v407 = vunpack.c.l.b16 %v371
  %v408 = vunpack.c.l.b16 %v372
  %v409 = vunpack.c.l.b16 %v373
  %v410 = vunpack.c.l.b16 %v374
  %v411 = vunpack.c.l.b16 %v375
  %v412 = vpack.c.b16 %v397, %v396
  %v413 = vpack.c.b16 %v399, %v398
  %v414 = vpack.c.b16 %v401, %v400
  %v415 = vpack.c.b16 %v403, %v402
  %v416 = vpack.c.b16 %v405, %v404
  %v417 = vpack.c.b16 %v407, %v406
  %v418 = vpack.c.b16 %v409, %v408
  %v419 = vpack.c.b16 %v411, %v410
  %428 = vmatpush.bf16.msra.mxu0 %v419
  %429 = vmatpush.bf16.msra.mxu0 %v418
  %430 = vmatpush.bf16.msra.mxu0 %v417
  %431 = vmatpush.bf16.msra.mxu0 %v416
  %432 = vmatpush.bf16.msra.mxu0 %v415
  %433 = vmatpush.bf16.msra.mxu0 %v414
  %434 = vmatpush.bf16.msra.mxu0 %v413
  %435 = vmatpush.bf16.msra.mxu0 %v412
  %436 = vmatmul.bf16.gmra.mxu0 %v352
  %v437 = vpop.f32.mrf.mxu0
  %v438 = vadd.f32 %v378, %v437
  %v439 = vpop.f32.mrf.mxu0
  %v440 = vadd.f32 %v378, %v439
  %441 = vmatmul.bf16.gmra.mxu0 %v353
  %v442 = vpop.f32.mrf.mxu0
  %v443 = vadd.f32 %v378, %v442
  %v444 = vpop.f32.mrf.mxu0
  %v445 = vadd.f32 %v378, %v444
  %446 = vmatmul.bf16.gmra.mxu0 %v354
  %v447 = vpop.f32.mrf.mxu0
  %v448 = vadd.f32 %v378, %v447
  %v449 = vpop.f32.mrf.mxu0
  %v450 = vadd.f32 %v378, %v449
  %451 = vmatmul.bf16.gmra.mxu0 %v355
  %v452 = vpop.f32.mrf.mxu0
  %v453 = vadd.f32 %v378, %v452
  %v454 = vpop.f32.mrf.mxu0
  %v455 = vadd.f32 %v378, %v454
  %456 = vmatmul.bf16.gmra.mxu0 %v356
  %v457 = vpop.f32.mrf.mxu0
  %v458 = vadd.f32 %v378, %v457
  %v459 = vpop.f32.mrf.mxu0
  %v460 = vadd.f32 %v378, %v459
  %461 = vmatmul.bf16.gmra.mxu0 %v357
  %v462 = vpop.f32.mrf.mxu0
  %v463 = vadd.f32 %v378, %v462
  %v464 = vpop.f32.mrf.mxu0
  %v465 = vadd.f32 %v378, %v464
  %466 = vmatmul.bf16.gmra.mxu0 %v358
  %v467 = vpop.f32.mrf.mxu0
  %v468 = vadd.f32 %v378, %v467
  %v469 = vpop.f32.mrf.mxu0
  %v470 = vadd.f32 %v378, %v469
  %471 = vmatmul.bf16.gmra.mxu0 %v359
  %v472 = vpop.f32.mrf.mxu0
  %v473 = vadd.f32 %v378, %v472
  %v474 = vpop.f32.mrf.mxu0
  %v475 = vadd.f32 %v378, %v474
  %476 = vdwg.mxu0
  %v477 = vmax.f32 %v438, 0.0
  %v478 = vmax.f32 %v440, 0.0
  %v479 = vmax.f32 %v443, 0.0
  %v480 = vmax.f32 %v445, 0.0
  %v481 = vmax.f32 %v448, 0.0
  %v482 = vmax.f32 %v450, 0.0
  %v483 = vmax.f32 %v453, 0.0
  %v484 = vmax.f32 %v455, 0.0
  %v485 = vmax.f32 %v458, 0.0
  %v486 = vmax.f32 %v460, 0.0
  %v487 = vmax.f32 %v463, 0.0
  %v488 = vmax.f32 %v465, 0.0
  %v489 = vmax.f32 %v468, 0.0
  %v490 = vmax.f32 %v470, 0.0
  %v491 = vmax.f32 %v473, 0.0
  %v492 = vmax.f32 %v475, 0.0
  %v493 = vpack.c.bf16 %v478, %v477
  %v494 = vpack.c.bf16 %v480, %v479
  %v495 = vpack.c.bf16 %v482, %v481
  %v496 = vpack.c.bf16 %v484, %v483
  %v497 = vpack.c.bf16 %v486, %v485
  %v498 = vpack.c.bf16 %v488, %v487
  %v499 = vpack.c.bf16 %v490, %v489
  %v500 = vpack.c.bf16 %v492, %v491
  %v501 = vld [vmem:[%s7] sm:$0xf]
  %v502 = vld [vmem:[%s7 + $0x4] sm:$0xf]
  %v503 = vld [vmem:[%s7 + $0x8] sm:$0xf]
  %v504 = vld [vmem:[%s7 + $0xc] sm:$0xf]
  %v505 = vld [vmem:[%s7 + $0x10] sm:$0xf]
  %v506 = vld [vmem:[%s7 + $0x14] sm:$0xf]
  %v507 = vld [vmem:[%s7 + $0x18] sm:$0xf]
  %v508 = vld [vmem:[%s7 + $0x1c] sm:$0xf]
  %v509 = vld [vmem:[%s7 + $0x20] sm:$0xf]
  %v510 = vld [vmem:[%s7 + $0x24] sm:$0xf]
  %v511 = vld [vmem:[%s7 + $0x28] sm:$0xf]
  %v512 = vld [vmem:[%s7 + $0x2c] sm:$0xf]
  %v513 = vld [vmem:[%s7 + $0x30] sm:$0xf]
  %v514 = vld [vmem:[%s7 + $0x34] sm:$0xf]
  %v515 = vld [vmem:[%s7 + $0x38] sm:$0xf]
  %v516 = vld [vmem:[%s7 + $0x3c] sm:$0xf]
  %v517 = vld [vmem:[%s8] sm:$0x1]
  %v519 = vperm.slane %v517, 0
  %v537 = vunpack.c.l.b16 %v501
  %v538 = vunpack.c.l.b16 %v502
  %v539 = vunpack.c.l.b16 %v503
  %v540 = vunpack.c.l.b16 %v504
  %v541 = vunpack.c.l.b16 %v505
  %v542 = vunpack.c.l.b16 %v506
  %v543 = vunpack.c.l.b16 %v507
  %v544 = vunpack.c.l.b16 %v508
  %v545 = vunpack.c.l.b16 %v509
  %v546 = vunpack.c.l.b16 %v510
  %v547 = vunpack.c.l.b16 %v511
  %v548 = vunpack.c.l.b16 %v512
  %v549 = vunpack.c.l.b16 %v513
  %v550 = vunpack.c.l.b16 %v514
  %v551 = vunpack.c.l.b16 %v515
  %v552 = vunpack.c.l.b16 %v516
  %v553 = vpack.c.b16 %v538, %v537
  %v554 = vpack.c.b16 %v540, %v539
  %v555 = vpack.c.b16 %v542, %v541
  %v556 = vpack.c.b16 %v544, %v543
  %v557 = vpack.c.b16 %v546, %v545
  %v558 = vpack.c.b16 %v548, %v547
  %v559 = vpack.c.b16 %v550, %v549
  %v560 = vpack.c.b16 %v552, %v551
  %569 = vmatpush.bf16.msra.mxu0 %v560
  %570 = vmatpush.bf16.msra.mxu0 %v559
  %571 = vmatpush.bf16.msra.mxu0 %v558
  %572 = vmatpush.bf16.msra.mxu0 %v557
  %573 = vmatpush.bf16.msra.mxu0 %v556
  %574 = vmatpush.bf16.msra.mxu0 %v555
  %575 = vmatpush.bf16.msra.mxu0 %v554
  %576 = vmatpush.bf16.msra.mxu0 %v553
  %577 = vmatmul.bf16.gmra.mxu0 %v493
  %v578 = vpop.f32.mrf.mxu0
  %v579 = vadd.f32 %v519, %v578
  %v580 = vpop.f32.mrf.mxu0
  %v581 = vadd.f32 %v519, %v580
  %582 = vmatmul.bf16.gmra.mxu0 %v494
  %v583 = vpop.f32.mrf.mxu0
  %v584 = vadd.f32 %v519, %v583
  %v585 = vpop.f32.mrf.mxu0
  %v586 = vadd.f32 %v519, %v585
  %587 = vmatmul.bf16.gmra.mxu0 %v495
  %v588 = vpop.f32.mrf.mxu0
  %v589 = vadd.f32 %v519, %v588
  %v590 = vpop.f32.mrf.mxu0
  %v591 = vadd.f32 %v519, %v590
  %592 = vmatmul.bf16.gmra.mxu0 %v496
  %v593 = vpop.f32.mrf.mxu0
  %v594 = vadd.f32 %v519, %v593
  %v595 = vpop.f32.mrf.mxu0
  %v596 = vadd.f32 %v519, %v595
  %597 = vmatmul.bf16.gmra.mxu0 %v497
  %v598 = vpop.f32.mrf.mxu0
  %v599 = vadd.f32 %v519, %v598
  %v600 = vpop.f32.mrf.mxu0
  %v601 = vadd.f32 %v519, %v600
  %602 = vmatmul.bf16.gmra.mxu0 %v498
  %v603 = vpop.f32.mrf.mxu0
  %v604 = vadd.f32 %v519, %v603
  %v605 = vpop.f32.mrf.mxu0
  %v606 = vadd.f32 %v519, %v605
  %607 = vmatmul.bf16.gmra.mxu0 %v499
  %v608 = vpop.f32.mrf.mxu0
  %v609 = vadd.f32 %v519, %v608
  %v610 = vpop.f32.mrf.mxu0
  %v611 = vadd.f32 %v519, %v610
  %612 = vmatmul.bf16.gmra.mxu0 %v500
  %v613 = vpop.f32.mrf.mxu0
  %v614 = vadd.f32 %v519, %v613
  %v615 = vpop.f32.mrf.mxu0
  %v616 = vadd.f32 %v519, %v615
  %617 = vdwg.mxu0
  %618 = vst [vmem:[%s9] sm:$0xff] %v579
  %619 = vst [vmem:[%s9 + $0x8] sm:$0xff] %v581
  %620 = vst [vmem:[%s9 + $0x10] sm:$0xff] %v584
  %621 = vst [vmem:[%s9 + $0x18] sm:$0xff] %v586
  %622 = vst [vmem:[%s9 + $0x20] sm:$0xff] %v589
  %623 = vst [vmem:[%s9 + $0x28] sm:$0xff] %v591
  %624 = vst [vmem:[%s9 + $0x30] sm:$0xff] %v594
  %625 = vst [vmem:[%s9 + $0x38] sm:$0xff] %v596
  %626 = vst [vmem:[%s9 + $0x40] sm:$0xff] %v599
  %627 = vst [vmem:[%s9 + $0x48] sm:$0xff] %v601
  %628 = vst [vmem:[%s9 + $0x50] sm:$0xff] %v604
  %629 = vst [vmem:[%s9 + $0x58] sm:$0xff] %v606
  %630 = vst [vmem:[%s9 + $0x60] sm:$0xff] %v609
  %631 = vst [vmem:[%s9 + $0x68] sm:$0xff] %v611
  %632 = vst [vmem:[%s9 + $0x70] sm:$0xff] %v614
  %633 = vst [vmem:[%s9 + $0x78] sm:$0xff] %v616
  %v634 = vld [vmem:[%s2] sm:$0xff]
  %635 = vmatpush.msra.mxu0 %v616
  %636 = vmatpush.msra.mxu0 %v614
  %637 = vmatpush.msra.mxu0 %v611
  %638 = vmatpush.msra.mxu0 %v609
  %639 = vmatpush.msra.mxu0 %v606
  %640 = vmatpush.msra.mxu0 %v604
  %641 = vmatpush.msra.mxu0 %v601
  %642 = vmatpush.msra.mxu0 %v599
  %643 = vmatpush.msra.mxu0 %v596
  %644 = vmatpush.msra.mxu0 %v594
  %645 = vmatpush.msra.mxu0 %v591
  %646 = vmatpush.msra.mxu0 %v589
  %647 = vmatpush.msra.mxu0 %v586
  %648 = vmatpush.msra.mxu0 %v584
  %649 = vmatpush.msra.mxu0 %v581
  %650 = vmatpush.msra.mxu0 %v579
  %651 = vmatmul.f32.gmra.mxu0 %v634
  %v652 = vpop.f32.mrf.mxu0
  %v653 = vadd.f32 0.0, %v652
  %654 = vdwg.mxu0
  %655 = vst [vmem:[%s10] sm:$0xff] %v653
  // Predicated region
  $region38: #{i2bgnn_forward.4} parent=0 // pred_check
    _
  $region39: #{i2bgnn_forward.4} parent=0 // pred_check_branch
    %657 = sbr.rel (0) target = $region41
  $region40: #{i2bgnn_forward.4} parent=0 // pred_region
    _
  $region41: #{i2bgnn_forward.4} parent=0 // pred_fallthru
    _
  // Predicated region
  $region42: #{i2bgnn_forward.4} parent=0 // pred_check
    _
  $region43: #{i2bgnn_forward.4} parent=0 // pred_check_branch
    %659 = sbr.rel (0) target = $region45
  $region44: #{i2bgnn_forward.4} parent=0 // pred_region
    _
  $region45: #{i2bgnn_forward.4} parent=0 // pred_fallthru
    _
  // Predicated region
  $region46: #{i2bgnn_forward.4} parent=0 // pred_check
    _
  $region47: #{i2bgnn_forward.4} parent=0 // pred_check_branch
    %661 = sbr.rel (0) target = $region49
  $region48: #{i2bgnn_forward.4} parent=0 // pred_region
    _
  $region49: #{i2bgnn_forward.4} parent=0 // pred_fallthru
    _
  // Predicated region
  $region50: #{i2bgnn_forward.4} parent=0 // pred_check
    _
  $region51: #{i2bgnn_forward.4} parent=0 // pred_check_branch
    %663 = sbr.rel (0) target = $region53
  $region52: #{i2bgnn_forward.4} parent=0 // pred_region
    _
  $region53: #{i2bgnn_forward.4} parent=0 // pred_fallthru
    _

</llo_original>
